<compile_context>
chip_gen: v5e
topology: v5e:2x2
jax: 0.10.0
libtpu: 0.0.40
codegen_flags: <defaults>
</compile_context>

<pallas_src>
import functools

import jax
import jax.numpy as jnp
from jax import lax
from jax.experimental import pallas as pl
from jax.experimental.pallas import tpu as pltpu

EPS = 1e-5


# --------------------------------------------------------------------------
# Kernels
# --------------------------------------------------------------------------
def _banded_conv_and_stats(xp, w_ref, z_ref, st_ref, bt, h):
    """Banded 3x3 conv over a stacked padded buffer + per-block BN partials.

    xp     : Ref (bt*(h+2), W*Ci)   bf16, per-image 1-row zero halos
    w_ref  : Ref (3, W*Ci, W*Co)    bf16 banded weights (one matrix per ky)
    z_ref  : Ref (bt*h, W*Co)       bf16 pre-BN conv output (lane dense)
    st_ref : Ref (1, 2, W*Co)       f32 per-block [sum, sum_sq] lane partials
    """
    r = bt * (h + 2)
    wco = z_ref.shape[1]
    # Three MXU matmuls over the whole stacked buffer (M = bt*(h+2)-2, f32
    # accumulation).  The ~2 rows/image straddling image boundaries are
    # computed but never read back.
    acc = jnp.dot(xp[0:r - 2, :], w_ref[0], preferred_element_type=jnp.float32)
    acc = acc + jnp.dot(xp[1:r - 1, :], w_ref[1],
                        preferred_element_type=jnp.float32)
    acc = acc + jnp.dot(xp[2:r, :], w_ref[2],
                        preferred_element_type=jnp.float32)

    ssum = jnp.zeros((1, wco), jnp.float32)
    ssq = jnp.zeros((1, wco), jnp.float32)
    for b in range(bt):                                  # static unroll
        sb = acc[b * (h + 2):b * (h + 2) + h, :]         # valid rows, image b
        z_ref[b * h:(b + 1) * h, :] = sb.astype(z_ref.dtype)
        ssum = ssum + jnp.sum(sb, axis=0, keepdims=True)
        ssq = ssq + jnp.sum(sb * sb, axis=0, keepdims=True)
    st_ref[0, 0:1, :] = ssum
    st_ref[0, 1:2, :] = ssq


def _conv1_stats_kernel(xp_ref, w_ref, z_ref, st_ref, *, bt, h):
    """conv1 on a pre-padded input block + per-block BN1 partial stats."""
    _banded_conv_and_stats(xp_ref, w_ref, z_ref, st_ref, bt, h)


def _bn_relu_conv2_kernel(z1_ref, sc_ref, sh_ref, w_ref, z2_ref, st_ref,
                          yp_ref, *, bt, h):
    """BN1(affine)+ReLU fused with conv2 + per-block BN2 partial stats."""
    wc = z1_ref.shape[1]
    # Affine + ReLU in f32 on the full lane-dense block, cast once for the MXU.
    y1 = jnp.maximum(
        z1_ref[...].astype(jnp.float32) * sc_ref[...] + sh_ref[...],
        0.0).astype(yp_ref.dtype)
    zero_row = jnp.zeros((1, wc), yp_ref.dtype)
    for b in range(bt):
        base = b * (h + 2)
        # Halo rows re-zeroed every step: cheap, and safe under megacore
        # sharding of the "parallel" grid axis (unlike a pid==0-only init).
        yp_ref[base:base + 1, :] = zero_row
        yp_ref[base + h + 1:base + h + 2, :] = zero_row
        yp_ref[base + 1:base + 1 + h, :] = y1[b * h:(b + 1) * h, :]
    _banded_conv_and_stats(yp_ref, w_ref, z2_ref, st_ref, bt, h)


def _bn_relu_kernel(z_ref, sc_ref, sh_ref, o_ref):
    """BN2(affine) + ReLU, pure lane-dense VPU work."""
    o_ref[...] = jnp.maximum(
        z_ref[...].astype(jnp.float32) * sc_ref[...] + sh_ref[...], 0.0)


# --------------------------------------------------------------------------
# Wrapper helpers (layout / packing / tiny finalization math only)
# --------------------------------------------------------------------------
def _banded_conv_weights(w_oihw, width):
    """Pack OIHW 3x3 conv weights into per-ky banded GEMM matrices.

    Returns (3, width*Cin, width*Cout) with
      out[ky, wi*Cin+ci, wo*Cout+co] = w[co, ci, ky, wi-wo+1]  (0 off-band),
    folding kx taps, input channels and W-direction zero padding into K.
    """
    _, _, kh, kw = w_oihw.shape
    w = jnp.transpose(w_oihw, (2, 3, 1, 0)).astype(jnp.float32)  # (kh,kw,ci,co)
    ci, co = w.shape[2], w.shape[3]
    wi = jnp.arange(width)[:, None]
    wo = jnp.arange(width)[None, :]
    kx = wi - wo + (kw // 2)
    valid = ((kx >= 0) & (kx < kw)).astype(jnp.float32)
    kxc = jnp.clip(kx, 0, kw - 1)
    banded = w[:, kxc, :, :] * valid[None, :, :, None, None]     # (kh,W,W,ci,co)
    banded = jnp.transpose(banded, (0, 1, 3, 2, 4))              # (kh,W,ci,W,co)
    return banded.reshape(kh, width * ci, width * co)


def _bn_scale_shift(st_blocks, gamma, beta, count, width, ch):
    """Finalize BatchNorm from per-block [sum, sum_sq] lane partials (O(C))."""
    tot = jnp.sum(st_blocks.astype(jnp.float32), axis=0)         # (2, W*C)
    tot = tot.reshape(2, width, ch).sum(axis=1)                  # (2, C)
    mean = tot[0] / count
    var = tot[1] / count - mean * mean    # biased var (BN training forward)
    scale = gamma.astype(jnp.float32) * lax.rsqrt(var + EPS)
    shift = beta.astype(jnp.float32) - mean * scale
    scale_l = jnp.tile(scale, width).reshape(1, width * ch)      # lane = w*C+c
    shift_l = jnp.tile(shift, width).reshape(1, width * ch)
    return scale_l, shift_l


def _pick_batch_tile(n, h):
    """Images per grid step: target ~256 MXU rows, divide N, keep (8,_) rule."""
    target = max(1, 256 // (h + 2))
    for bt in range(min(n, target), 0, -1):
        if n % bt:
            continue
        if bt == n or ((bt * (h + 2)) % 8 == 0 and (bt * h) % 8 == 0):
            return bt
    return n


def _vmem_limit_bytes():
    """~3/4 of chip VMEM, capped: ~96 MiB on v5e/v6e, ~48 MiB on v7x."""
    try:
        cap = int(pltpu.get_tpu_info().vmem_capacity_bytes)
    except Exception:
        cap = 64 * 1024 * 1024
    return int(max(48 * 1024 * 1024, min(96 * 1024 * 1024, (cap * 3) // 4)))


# --------------------------------------------------------------------------
# Wrapper
# --------------------------------------------------------------------------
@jax.jit
def down_conv2d_block(x_nchw, w1_oihw, g1, b1, w2_oihw, g2, b2):
    """DownConv2DBlock forward. NCHW input, PyTorch (OIHW) conv weights."""
    N, Cin, H, W = x_nchw.shape
    Cout = w1_oihw.shape[0]
    f32, bf16 = jnp.float32, jnp.bfloat16

    Bt = _pick_batch_tile(N, H)
    G = N // Bt

    # ---- glue: lane-dense layout, H halo pre-pad, bf16 weight packing -------
    x_nhwc = jnp.transpose(x_nchw, (0, 2, 3, 1)).astype(bf16)
    x_pad = jnp.pad(x_nhwc, ((0, 0), (1, 1), (0, 0), (0, 0)))    # H halo rows
    x_pad2d = x_pad.reshape(N * (H + 2), W * Cin)
    wb1 = _banded_conv_weights(w1_oihw, W).astype(bf16)   # (3, W*Cin,  W*Cout)
    wb2 = _banded_conv_weights(w2_oihw, W).astype(bf16)   # (3, W*Cout, W*Cout)

    cparams = pltpu.CompilerParams(
        dimension_semantics=("parallel",),       # shard batch blocks over TCs
        vmem_limit_bytes=_vmem_limit_bytes())

    blk2 = lambda i: (i, 0)
    blk3 = lambda i: (i, 0, 0)
    whole2 = lambda i: (0, 0)
    whole3 = lambda i: (0, 0, 0)

    # ---- stage 1: conv1 (banded GEMM, M ~= Bt*(H+2)) + BN1 partials ---------
    z1, st1 = pl.pallas_call(
        functools.partial(_conv1_stats_kernel, bt=Bt, h=H),
        grid=(G,),
        in_specs=[
            pl.BlockSpec((Bt * (H + 2), W * Cin), blk2),
            pl.BlockSpec((3, W * Cin, W * Cout), whole3),
        ],
        out_specs=[
            pl.BlockSpec((Bt * H, W * Cout), blk2),
            pl.BlockSpec((1, 2, W * Cout), blk3),
        ],
        out_shape=[
            jax.ShapeDtypeStruct((N * H, W * Cout), bf16),
            jax.ShapeDtypeStruct((G, 2, W * Cout), f32),
        ],
        compiler_params=cparams,
    )(x_pad2d, wb1)

    # ---- BN1 finalize (tiny, hoisted out of the per-step kernel bodies) -----
    count = float(N * H * W)
    sc1, sh1 = _bn_scale_shift(st1, g1, b1, count, W, Cout)

    # ---- stage 2: BN1 + ReLU fused with conv2 + BN2 partials ----------------
    z2, st2 = pl.pallas_call(
        functools.partial(_bn_relu_conv2_kernel, bt=Bt, h=H),
        grid=(G,),
        in_specs=[
            pl.BlockSpec((Bt * H, W * Cout), blk2),
            pl.BlockSpec((1, W * Cout), whole2),
            pl.BlockSpec((1, W * Cout), whole2),
            pl.BlockSpec((3, W * Cout, W * Cout), whole3),
        ],
        out_specs=[
            pl.BlockSpec((Bt * H, W * Cout), blk2),
            pl.BlockSpec((1, 2, W * Cout), blk3),
        ],
        out_shape=[
            jax.ShapeDtypeStruct((N * H, W * Cout), bf16),
            jax.ShapeDtypeStruct((G, 2, W * Cout), f32),
        ],
        scratch_shapes=[pltpu.VMEM((Bt * (H + 2), W * Cout), bf16)],
        compiler_params=cparams,
    )(z1, sc1, sh1, wb2)

    # ---- BN2 finalize + stage 3: BN2 + ReLU ---------------------------------
    sc2, sh2 = _bn_scale_shift(st2, g2, b2, count, W, Cout)
    out2d = pl.pallas_call(
        _bn_relu_kernel,
        grid=(G,),
        in_specs=[
            pl.BlockSpec((Bt * H, W * Cout), blk2),
            pl.BlockSpec((1, W * Cout), whole2),
            pl.BlockSpec((1, W * Cout), whole2),
        ],
        out_specs=pl.BlockSpec((Bt * H, W * Cout), blk2),
        out_shape=jax.ShapeDtypeStruct((N * H, W * Cout), f32),
        compiler_params=cparams,
    )(z2, sc2, sh2)

    # ---- glue: back to NCHW --------------------------------------------------
    return jnp.transpose(out2d.reshape(N, H, W, Cout), (0, 3, 1, 2))


# --------------------------------------------------------------------------
# Pure-JAX reference (for validation)
# --------------------------------------------------------------------------
def _reference(x_nchw, w1_oihw, g1, b1, w2_oihw, g2, b2):
    def conv(x, w):
        return lax.conv_general_dilated(
            x, w, window_strides=(1, 1), padding="SAME",
            dimension_numbers=("NCHW", "OIHW", "NCHW"))

    def bn_relu(y, g, b):
        mean = jnp.mean(y, axis=(0, 2, 3), keepdims=True)
        var = jnp.mean((y - mean) ** 2, axis=(0, 2, 3), keepdims=True)
        y = (y - mean) * lax.rsqrt(var + EPS)
        y = y * g.reshape(1, -1, 1, 1) + b.reshape(1, -1, 1, 1)
        return jnp.maximum(y, 0.0)

    y = bn_relu(conv(x_nchw, w1_oihw), g1, b1)
    return bn_relu(conv(y, w2_oihw), g2, b2)


if __name__ == "__main__":
    # Small shapes consistent with the module (NCHW input).
    N, Cin, H, W = 2, 4, 16, 16
    Cout = 8

    key = jax.random.PRNGKey(0)
    k = jax.random.split(key, 7)
    x = jax.random.normal(k[0], (N, Cin, H, W), jnp.float32)
    w1 = 0.1 * jax.random.normal(k[1], (Cout, Cin, 3, 3), jnp.float32)   # OIHW
    w2 = 0.1 * jax.random.normal(k[2], (Cout, Cout, 3, 3), jnp.float32)  # OIHW
    g1 = 1.0 + 0.1 * jax.random.normal(k[3], (Cout,), jnp.float32)
    b1 = 0.1 * jax.random.normal(k[4], (Cout,), jnp.float32)
    g2 = 1.0 + 0.1 * jax.random.normal(k[5], (Cout,), jnp.float32)
    b2 = 0.1 * jax.random.normal(k[6], (Cout,), jnp.float32)

    out = jax.block_until_ready(down_conv2d_block(x, w1, g1, b1, w2, g2, b2))
    ref = jax.block_until_ready(_reference(x, w1, g1, b1, w2, g2, b2))

    assert out.shape == (N, Cout, H, W), out.shape
    max_err = float(jnp.max(jnp.abs(out - ref)))
    # Tolerance reflects bf16 MXU operands and bf16 z1/z2 intermediates
    # (f32 accumulation and f32 BN statistics are kept).
    assert jnp.allclose(out, ref, rtol=5e-2, atol=5e-2), max_err

    print("KERNEL_OK")
</pallas_src>

<mosaic_0001>
module attributes {stable_mosaic.version = 11 : i64} {
  func.func @_conv1_stats_kernel(%arg0: i32, %arg1: memref<36x64xbf16, #tpu.memory_space<vmem>>, %arg2: memref<3x64x128xbf16, #tpu.memory_space<vmem>>, %arg3: memref<32x128xbf16, #tpu.memory_space<vmem>>, %arg4: memref<1x2x128xf32, #tpu.memory_space<vmem>>) attributes {dimension_semantics = [#tpu.dimension_semantics<parallel>], iteration_bounds = array<i64: 1>, scalar_prefetch = 0 : i64, scratch_operands = 0 : i64, tpu.core_type = #tpu.core_type<tc>, window_params = [{transform_indices = @transform_0, window_bounds = array<i64: 36, 64>}, {pipeline_mode = #tpu.pipeline_mode<synchronous>, transform_indices = @transform_1, window_bounds = array<i64: 3, 64, 128>}, {transform_indices = @transform_2, window_bounds = array<i64: 32, 128>}, {transform_indices = @transform_3, window_bounds = array<i64: 1, 2, 128>}]} {
    %c0 = arith.constant 0 : index
    %c0_0 = arith.constant 0 : index
    %0 = vector.load %arg1[%c0, %c0_0] : memref<36x64xbf16, #tpu.memory_space<vmem>>, vector<34x64xbf16>
    %c0_1 = arith.constant 0 : index
    %c0_2 = arith.constant 0 : index
    %c0_3 = arith.constant 0 : index
    %1 = vector.load %arg2[%c0_1, %c0_2, %c0_3] : memref<3x64x128xbf16, #tpu.memory_space<vmem>>, vector<1x64x128xbf16>
    %2 = vector.shape_cast %1 : vector<1x64x128xbf16> to vector<64x128xbf16>
    %cst = arith.constant dense<0.000000e+00> : vector<34x128xf32>
    %3 = tpu.matmul %0, %2, %cst {dimension_numbers = #tpu.dot_dimension_numbers<[1], [0], [0], [1], [0, 0, 1, 1], [], []>} : vector<34x64xbf16>, vector<64x128xbf16>, vector<34x128xf32> -> vector<34x128xf32>
    %c1 = arith.constant 1 : index
    %c0_4 = arith.constant 0 : index
    %4 = vector.load %arg1[%c1, %c0_4] : memref<36x64xbf16, #tpu.memory_space<vmem>>, vector<34x64xbf16>
    %c1_5 = arith.constant 1 : index
    %c0_6 = arith.constant 0 : index
    %c0_7 = arith.constant 0 : index
    %5 = vector.load %arg2[%c1_5, %c0_6, %c0_7] : memref<3x64x128xbf16, #tpu.memory_space<vmem>>, vector<1x64x128xbf16>
    %6 = vector.shape_cast %5 : vector<1x64x128xbf16> to vector<64x128xbf16>
    %cst_8 = arith.constant dense<0.000000e+00> : vector<34x128xf32>
    %7 = tpu.matmul %4, %6, %cst_8 {dimension_numbers = #tpu.dot_dimension_numbers<[1], [0], [0], [1], [0, 0, 1, 1], [], []>} : vector<34x64xbf16>, vector<64x128xbf16>, vector<34x128xf32> -> vector<34x128xf32>
    %8 = arith.addf %3, %7 : vector<34x128xf32>
    %c2 = arith.constant 2 : index
    %c0_9 = arith.constant 0 : index
    %9 = vector.load %arg1[%c2, %c0_9] : memref<36x64xbf16, #tpu.memory_space<vmem>>, vector<34x64xbf16>
    %c2_10 = arith.constant 2 : index
    %c0_11 = arith.constant 0 : index
    %c0_12 = arith.constant 0 : index
    %10 = vector.load %arg2[%c2_10, %c0_11, %c0_12] : memref<3x64x128xbf16, #tpu.memory_space<vmem>>, vector<1x64x128xbf16>
    %11 = vector.shape_cast %10 : vector<1x64x128xbf16> to vector<64x128xbf16>
    %cst_13 = arith.constant dense<0.000000e+00> : vector<34x128xf32>
    %12 = tpu.matmul %9, %11, %cst_13 {dimension_numbers = #tpu.dot_dimension_numbers<[1], [0], [0], [1], [0, 0, 1, 1], [], []>} : vector<34x64xbf16>, vector<64x128xbf16>, vector<34x128xf32> -> vector<34x128xf32>
    %13 = arith.addf %8, %12 : vector<34x128xf32>
    %cst_14 = arith.constant 0.000000e+00 : f32
    %14 = vector.broadcast %cst_14 : f32 to vector<1x128xf32>
    %cst_15 = arith.constant 0.000000e+00 : f32
    %15 = vector.broadcast %cst_15 : f32 to vector<1x128xf32>
    %16 = vector.extract_strided_slice %13 {offsets = [0, 0], sizes = [16, 128], strides = [1, 1]} : vector<34x128xf32> to vector<16x128xf32>
    %17 = arith.truncf %16 : vector<16x128xf32> to vector<16x128xbf16>
    %c0_16 = arith.constant 0 : index
    %c0_17 = arith.constant 0 : index
    %18 = vector.load %arg3[%c0_16, %c0_17] : memref<32x128xbf16, #tpu.memory_space<vmem>>, vector<16x128xbf16>
    tpu.vector_store %arg3[%c0_16, %c0_17], %17 {strides = array<i32>} : memref<32x128xbf16, #tpu.memory_space<vmem>>, vector<16x128xbf16>,
    %cst_18 = arith.constant dense<0.000000e+00> : vector<128xf32>
    %19 = vector.multi_reduction <add>, %16, %cst_18 [0] : vector<16x128xf32> to vector<128xf32>
    %20 = vector.shape_cast %19 : vector<128xf32> to vector<1x128xf32>
    %21 = arith.addf %14, %20 : vector<1x128xf32>
    %22 = arith.mulf %16, %16 : vector<16x128xf32>
    %cst_19 = arith.constant dense<0.000000e+00> : vector<128xf32>
    %23 = vector.multi_reduction <add>, %22, %cst_19 [0] : vector<16x128xf32> to vector<128xf32>
    %24 = vector.shape_cast %23 : vector<128xf32> to vector<1x128xf32>
    %25 = arith.addf %15, %24 : vector<1x128xf32>
    %26 = vector.extract_strided_slice %13 {offsets = [18, 0], sizes = [16, 128], strides = [1, 1]} : vector<34x128xf32> to vector<16x128xf32>
    %27 = arith.truncf %26 : vector<16x128xf32> to vector<16x128xbf16>
    %c16 = arith.constant 16 : index
    %c0_20 = arith.constant 0 : index
    %28 = vector.load %arg3[%c16, %c0_20] : memref<32x128xbf16, #tpu.memory_space<vmem>>, vector<16x128xbf16>
    tpu.vector_store %arg3[%c16, %c0_20], %27 {strides = array<i32>} : memref<32x128xbf16, #tpu.memory_space<vmem>>, vector<16x128xbf16>,
    %cst_21 = arith.constant dense<0.000000e+00> : vector<128xf32>
    %29 = vector.multi_reduction <add>, %26, %cst_21 [0] : vector<16x128xf32> to vector<128xf32>
    %30 = vector.shape_cast %29 : vector<128xf32> to vector<1x128xf32>
    %31 = arith.addf %21, %30 : vector<1x128xf32>
    %32 = arith.mulf %26, %26 : vector<16x128xf32>
    %cst_22 = arith.constant dense<0.000000e+00> : vector<128xf32>
    %33 = vector.multi_reduction <add>, %32, %cst_22 [0] : vector<16x128xf32> to vector<128xf32>
    %34 = vector.shape_cast %33 : vector<128xf32> to vector<1x128xf32>
    %35 = arith.addf %25, %34 : vector<1x128xf32>
    %c0_23 = arith.constant 0 : index
    %c0_24 = arith.constant 0 : index
    %c0_25 = arith.constant 0 : index
    %36 = vector.load %arg4[%c0_23, %c0_24, %c0_25] : memref<1x2x128xf32, #tpu.memory_space<vmem>>, vector<1x1x128xf32>
    %37 = vector.shape_cast %36 : vector<1x1x128xf32> to vector<1x128xf32>
    %38 = vector.shape_cast %31 : vector<1x128xf32> to vector<1x1x128xf32>
    tpu.vector_store %arg4[%c0_23, %c0_24, %c0_25], %38 {strides = array<i32>} : memref<1x2x128xf32, #tpu.memory_space<vmem>>, vector<1x1x128xf32>,
    %c0_26 = arith.constant 0 : index
    %c1_27 = arith.constant 1 : index
    %c0_28 = arith.constant 0 : index
    %39 = vector.load %arg4[%c0_26, %c1_27, %c0_28] : memref<1x2x128xf32, #tpu.memory_space<vmem>>, vector<1x1x128xf32>
    %40 = vector.shape_cast %39 : vector<1x1x128xf32> to vector<1x128xf32>
    %41 = vector.shape_cast %35 : vector<1x128xf32> to vector<1x1x128xf32>
    tpu.vector_store %arg4[%c0_26, %c1_27, %c0_28], %41 {strides = array<i32>} : memref<1x2x128xf32, #tpu.memory_space<vmem>>, vector<1x1x128xf32>,
    return
  }
  func.func @transform_0(%arg0: i32) -> (i32, i32) {
    %c0_i32 = arith.constant 0 : i32
    %c0_i32_0 = arith.constant 0 : i32
    return %arg0, %c0_i32 : i32, i32
  }
  func.func @transform_1(%arg0: i32) -> (i32, i32, i32) {
    %c0_i32 = arith.constant 0 : i32
    %c0_i32_0 = arith.constant 0 : i32
    %c0_i32_1 = arith.constant 0 : i32
    %c0_i32_2 = arith.constant 0 : i32
    return %c0_i32, %c0_i32_0, %c0_i32_1 : i32, i32, i32
  }
  func.func @transform_2(%arg0: i32) -> (i32, i32) {
    %c0_i32 = arith.constant 0 : i32
    %c0_i32_0 = arith.constant 0 : i32
    return %arg0, %c0_i32 : i32, i32
  }
  func.func @transform_3(%arg0: i32) -> (i32, i32, i32) {
    %c0_i32 = arith.constant 0 : i32
    %c0_i32_0 = arith.constant 0 : i32
    %c0_i32_1 = arith.constant 0 : i32
    return %arg0, %c0_i32, %c0_i32_0 : i32, i32, i32
  }
}

module attributes {stable_mosaic.version = 11 : i64} {
  func.func @_bn_relu_conv2_kernel(%arg0: i32, %arg1: memref<32x128xbf16, #tpu.memory_space<vmem>>, %arg2: memref<1x128xf32, #tpu.memory_space<vmem>>, %arg3: memref<1x128xf32, #tpu.memory_space<vmem>>, %arg4: memref<3x128x128xbf16, #tpu.memory_space<vmem>>, %arg5: memref<32x128xbf16, #tpu.memory_space<vmem>>, %arg6: memref<1x2x128xf32, #tpu.memory_space<vmem>>, %arg7: memref<36x128xbf16, #tpu.memory_space<vmem>>) attributes {dimension_semantics = [#tpu.dimension_semantics<parallel>], iteration_bounds = array<i64: 1>, scalar_prefetch = 0 : i64, scratch_operands = 1 : i64, tpu.core_type = #tpu.core_type<tc>, window_params = [{transform_indices = @transform_0, window_bounds = array<i64: 32, 128>}, {pipeline_mode = #tpu.pipeline_mode<synchronous>, transform_indices = @transform_1, window_bounds = array<i64: 1, 128>}, {pipeline_mode = #tpu.pipeline_mode<synchronous>, transform_indices = @transform_2, window_bounds = array<i64: 1, 128>}, {pipeline_mode = #tpu.pipeline_mode<synchronous>, transform_indices = @transform_3, window_bounds = array<i64: 3, 128, 128>}, {transform_indices = @transform_4, window_bounds = array<i64: 32, 128>}, {transform_indices = @transform_5, window_bounds = array<i64: 1, 2, 128>}]} {
    %c0 = arith.constant 0 : index
    %c0_0 = arith.constant 0 : index
    %0 = vector.load %arg1[%c0, %c0_0] : memref<32x128xbf16, #tpu.memory_space<vmem>>, vector<32x128xbf16>
    %1 = arith.extf %0 : vector<32x128xbf16> to vector<32x128xf32>
    %c0_1 = arith.constant 0 : index
    %c0_2 = arith.constant 0 : index
    %2 = vector.load %arg2[%c0_1, %c0_2] : memref<1x128xf32, #tpu.memory_space<vmem>>, vector<1x128xf32>
    %3 = vector.broadcast %2 : vector<1x128xf32> to vector<32x128xf32>
    %4 = arith.mulf %1, %3 : vector<32x128xf32>
    %c0_3 = arith.constant 0 : index
    %c0_4 = arith.constant 0 : index
    %5 = vector.load %arg3[%c0_3, %c0_4] : memref<1x128xf32, #tpu.memory_space<vmem>>, vector<1x128xf32>
    %6 = vector.broadcast %5 : vector<1x128xf32> to vector<32x128xf32>
    %7 = arith.addf %4, %6 : vector<32x128xf32>
    %cst = arith.constant 0.000000e+00 : f32
    %8 = vector.broadcast %cst : f32 to vector<32x128xf32>
    %9 = arith.maximumf %7, %8 : vector<32x128xf32>
    %10 = arith.truncf %9 : vector<32x128xf32> to vector<32x128xbf16>
    %cst_5 = arith.constant 0.000000e+00 : bf16
    %11 = vector.broadcast %cst_5 : bf16 to vector<1x128xbf16>
    %c0_6 = arith.constant 0 : index
    %c0_7 = arith.constant 0 : index
    %12 = vector.load %arg7[%c0_6, %c0_7] : memref<36x128xbf16, #tpu.memory_space<vmem>>, vector<1x128xbf16>
    tpu.vector_store %arg7[%c0_6, %c0_7], %11 {strides = array<i32>} : memref<36x128xbf16, #tpu.memory_space<vmem>>, vector<1x128xbf16>,
    %c17 = arith.constant 17 : index
    %c0_8 = arith.constant 0 : index
    %13 = vector.load %arg7[%c17, %c0_8] : memref<36x128xbf16, #tpu.memory_space<vmem>>, vector<1x128xbf16>
    tpu.vector_store %arg7[%c17, %c0_8], %11 {strides = array<i32>} : memref<36x128xbf16, #tpu.memory_space<vmem>>, vector<1x128xbf16>,
    %14 = vector.extract_strided_slice %10 {offsets = [0, 0], sizes = [16, 128], strides = [1, 1]} : vector<32x128xbf16> to vector<16x128xbf16>
    %c1 = arith.constant 1 : index
    %c0_9 = arith.constant 0 : index
    %15 = vector.load %arg7[%c1, %c0_9] : memref<36x128xbf16, #tpu.memory_space<vmem>>, vector<16x128xbf16>
    tpu.vector_store %arg7[%c1, %c0_9], %14 {strides = array<i32>} : memref<36x128xbf16, #tpu.memory_space<vmem>>, vector<16x128xbf16>,
    %c18 = arith.constant 18 : index
    %c0_10 = arith.constant 0 : index
    %16 = vector.load %arg7[%c18, %c0_10] : memref<36x128xbf16, #tpu.memory_space<vmem>>, vector<1x128xbf16>
    tpu.vector_store %arg7[%c18, %c0_10], %11 {strides = array<i32>} : memref<36x128xbf16, #tpu.memory_space<vmem>>, vector<1x128xbf16>,
    %c35 = arith.constant 35 : index
    %c0_11 = arith.constant 0 : index
    %17 = vector.load %arg7[%c35, %c0_11] : memref<36x128xbf16, #tpu.memory_space<vmem>>, vector<1x128xbf16>
    tpu.vector_store %arg7[%c35, %c0_11], %11 {strides = array<i32>} : memref<36x128xbf16, #tpu.memory_space<vmem>>, vector<1x128xbf16>,
    %18 = vector.extract_strided_slice %10 {offsets = [16, 0], sizes = [16, 128], strides = [1, 1]} : vector<32x128xbf16> to vector<16x128xbf16>
    %c19 = arith.constant 19 : index
    %c0_12 = arith.constant 0 : index
    %19 = vector.load %arg7[%c19, %c0_12] : memref<36x128xbf16, #tpu.memory_space<vmem>>, vector<16x128xbf16>
    tpu.vector_store %arg7[%c19, %c0_12], %18 {strides = array<i32>} : memref<36x128xbf16, #tpu.memory_space<vmem>>, vector<16x128xbf16>,
    %c0_13 = arith.constant 0 : index
    %c0_14 = arith.constant 0 : index
    %20 = vector.load %arg7[%c0_13, %c0_14] : memref<36x128xbf16, #tpu.memory_space<vmem>>, vector<34x128xbf16>
    %c0_15 = arith.constant 0 : index
    %c0_16 = arith.constant 0 : index
    %c0_17 = arith.constant 0 : index
    %21 = vector.load %arg4[%c0_15, %c0_16, %c0_17] : memref<3x128x128xbf16, #tpu.memory_space<vmem>>, vector<1x128x128xbf16>
    %22 = vector.shape_cast %21 : vector<1x128x128xbf16> to vector<128x128xbf16>
    %cst_18 = arith.constant dense<0.000000e+00> : vector<34x128xf32>
    %23 = tpu.matmul %20, %22, %cst_18 {dimension_numbers = #tpu.dot_dimension_numbers<[1], [0], [0], [1], [0, 0, 1, 1], [], []>} : vector<34x128xbf16>, vector<128x128xbf16>, vector<34x128xf32> -> vector<34x128xf32>
    %c1_19 = arith.constant 1 : index
    %c0_20 = arith.constant 0 : index
    %24 = vector.load %arg7[%c1_19, %c0_20] : memref<36x128xbf16, #tpu.memory_space<vmem>>, vector<34x128xbf16>
    %c1_21 = arith.constant 1 : index
    %c0_22 = arith.constant 0 : index
    %c0_23 = arith.constant 0 : index
    %25 = vector.load %arg4[%c1_21, %c0_22, %c0_23] : memref<3x128x128xbf16, #tpu.memory_space<vmem>>, vector<1x128x128xbf16>
    %26 = vector.shape_cast %25 : vector<1x128x128xbf16> to vector<128x128xbf16>
    %cst_24 = arith.constant dense<0.000000e+00> : vector<34x128xf32>
    %27 = tpu.matmul %24, %26, %cst_24 {dimension_numbers = #tpu.dot_dimension_numbers<[1], [0], [0], [1], [0, 0, 1, 1], [], []>} : vector<34x128xbf16>, vector<128x128xbf16>, vector<34x128xf32> -> vector<34x128xf32>
    %28 = arith.addf %23, %27 : vector<34x128xf32>
    %c2 = arith.constant 2 : index
    %c0_25 = arith.constant 0 : index
    %29 = vector.load %arg7[%c2, %c0_25] : memref<36x128xbf16, #tpu.memory_space<vmem>>, vector<34x128xbf16>
    %c2_26 = arith.constant 2 : index
    %c0_27 = arith.constant 0 : index
    %c0_28 = arith.constant 0 : index
    %30 = vector.load %arg4[%c2_26, %c0_27, %c0_28] : memref<3x128x128xbf16, #tpu.memory_space<vmem>>, vector<1x128x128xbf16>
    %31 = vector.shape_cast %30 : vector<1x128x128xbf16> to vector<128x128xbf16>
    %cst_29 = arith.constant dense<0.000000e+00> : vector<34x128xf32>
    %32 = tpu.matmul %29, %31, %cst_29 {dimension_numbers = #tpu.dot_dimension_numbers<[1], [0], [0], [1], [0, 0, 1, 1], [], []>} : vector<34x128xbf16>, vector<128x128xbf16>, vector<34x128xf32> -> vector<34x128xf32>
    %33 = arith.addf %28, %32 : vector<34x128xf32>
    %cst_30 = arith.constant 0.000000e+00 : f32
    %34 = vector.broadcast %cst_30 : f32 to vector<1x128xf32>
    %cst_31 = arith.constant 0.000000e+00 : f32
    %35 = vector.broadcast %cst_31 : f32 to vector<1x128xf32>
    %36 = vector.extract_strided_slice %33 {offsets = [0, 0], sizes = [16, 128], strides = [1, 1]} : vector<34x128xf32> to vector<16x128xf32>
    %37 = arith.truncf %36 : vector<16x128xf32> to vector<16x128xbf16>
    %c0_32 = arith.constant 0 : index
    %c0_33 = arith.constant 0 : index
    %38 = vector.load %arg5[%c0_32, %c0_33] : memref<32x128xbf16, #tpu.memory_space<vmem>>, vector<16x128xbf16>
    tpu.vector_store %arg5[%c0_32, %c0_33], %37 {strides = array<i32>} : memref<32x128xbf16, #tpu.memory_space<vmem>>, vector<16x128xbf16>,
    %cst_34 = arith.constant dense<0.000000e+00> : vector<128xf32>
    %39 = vector.multi_reduction <add>, %36, %cst_34 [0] : vector<16x128xf32> to vector<128xf32>
    %40 = vector.shape_cast %39 : vector<128xf32> to vector<1x128xf32>
    %41 = arith.addf %34, %40 : vector<1x128xf32>
    %42 = arith.mulf %36, %36 : vector<16x128xf32>
    %cst_35 = arith.constant dense<0.000000e+00> : vector<128xf32>
    %43 = vector.multi_reduction <add>, %42, %cst_35 [0] : vector<16x128xf32> to vector<128xf32>
    %44 = vector.shape_cast %43 : vector<128xf32> to vector<1x128xf32>
    %45 = arith.addf %35, %44 : vector<1x128xf32>
    %46 = vector.extract_strided_slice %33 {offsets = [18, 0], sizes = [16, 128], strides = [1, 1]} : vector<34x128xf32> to vector<16x128xf32>
    %47 = arith.truncf %46 : vector<16x128xf32> to vector<16x128xbf16>
    %c16 = arith.constant 16 : index
    %c0_36 = arith.constant 0 : index
    %48 = vector.load %arg5[%c16, %c0_36] : memref<32x128xbf16, #tpu.memory_space<vmem>>, vector<16x128xbf16>
    tpu.vector_store %arg5[%c16, %c0_36], %47 {strides = array<i32>} : memref<32x128xbf16, #tpu.memory_space<vmem>>, vector<16x128xbf16>,
    %cst_37 = arith.constant dense<0.000000e+00> : vector<128xf32>
    %49 = vector.multi_reduction <add>, %46, %cst_37 [0] : vector<16x128xf32> to vector<128xf32>
    %50 = vector.shape_cast %49 : vector<128xf32> to vector<1x128xf32>
    %51 = arith.addf %41, %50 : vector<1x128xf32>
    %52 = arith.mulf %46, %46 : vector<16x128xf32>
    %cst_38 = arith.constant dense<0.000000e+00> : vector<128xf32>
    %53 = vector.multi_reduction <add>, %52, %cst_38 [0] : vector<16x128xf32> to vector<128xf32>
    %54 = vector.shape_cast %53 : vector<128xf32> to vector<1x128xf32>
    %55 = arith.addf %45, %54 : vector<1x128xf32>
    %c0_39 = arith.constant 0 : index
    %c0_40 = arith.constant 0 : index
    %c0_41 = arith.constant 0 : index
    %56 = vector.load %arg6[%c0_39, %c0_40, %c0_41] : memref<1x2x128xf32, #tpu.memory_space<vmem>>, vector<1x1x128xf32>
    %57 = vector.shape_cast %56 : vector<1x1x128xf32> to vector<1x128xf32>
    %58 = vector.shape_cast %51 : vector<1x128xf32> to vector<1x1x128xf32>
    tpu.vector_store %arg6[%c0_39, %c0_40, %c0_41], %58 {strides = array<i32>} : memref<1x2x128xf32, #tpu.memory_space<vmem>>, vector<1x1x128xf32>,
    %c0_42 = arith.constant 0 : index
    %c1_43 = arith.constant 1 : index
    %c0_44 = arith.constant 0 : index
    %59 = vector.load %arg6[%c0_42, %c1_43, %c0_44] : memref<1x2x128xf32, #tpu.memory_space<vmem>>, vector<1x1x128xf32>
    %60 = vector.shape_cast %59 : vector<1x1x128xf32> to vector<1x128xf32>
    %61 = vector.shape_cast %55 : vector<1x128xf32> to vector<1x1x128xf32>
    tpu.vector_store %arg6[%c0_42, %c1_43, %c0_44], %61 {strides = array<i32>} : memref<1x2x128xf32, #tpu.memory_space<vmem>>, vector<1x1x128xf32>,
    return
  }
  func.func @transform_0(%arg0: i32) -> (i32, i32) {
    %c0_i32 = arith.constant 0 : i32
    %c0_i32_0 = arith.constant 0 : i32
    return %arg0, %c0_i32 : i32, i32
  }
  func.func @transform_1(%arg0: i32) -> (i32, i32) {
    %c0_i32 = arith.constant 0 : i32
    %c0_i32_0 = arith.constant 0 : i32
    %c0_i32_1 = arith.constant 0 : i32
    return %c0_i32, %c0_i32_0 : i32, i32
  }
  func.func @transform_2(%arg0: i32) -> (i32, i32) {
    %c0_i32 = arith.constant 0 : i32
    %c0_i32_0 = arith.constant 0 : i32
    %c0_i32_1 = arith.constant 0 : i32
    return %c0_i32, %c0_i32_0 : i32, i32
  }
  func.func @transform_3(%arg0: i32) -> (i32, i32, i32) {
    %c0_i32 = arith.constant 0 : i32
    %c0_i32_0 = arith.constant 0 : i32
    %c0_i32_1 = arith.constant 0 : i32
    %c0_i32_2 = arith.constant 0 : i32
    return %c0_i32, %c0_i32_0, %c0_i32_1 : i32, i32, i32
  }
  func.func @transform_4(%arg0: i32) -> (i32, i32) {
    %c0_i32 = arith.constant 0 : i32
    %c0_i32_0 = arith.constant 0 : i32
    return %arg0, %c0_i32 : i32, i32
  }
  func.func @transform_5(%arg0: i32) -> (i32, i32, i32) {
    %c0_i32 = arith.constant 0 : i32
    %c0_i32_0 = arith.constant 0 : i32
    %c0_i32_1 = arith.constant 0 : i32
    return %arg0, %c0_i32, %c0_i32_0 : i32, i32, i32
  }
}

module attributes {stable_mosaic.version = 11 : i64} {
  func.func @_bn_relu_kernel(%arg0: i32, %arg1: memref<32x128xbf16, #tpu.memory_space<vmem>>, %arg2: memref<1x128xf32, #tpu.memory_space<vmem>>, %arg3: memref<1x128xf32, #tpu.memory_space<vmem>>, %arg4: memref<32x128xf32, #tpu.memory_space<vmem>>) attributes {dimension_semantics = [#tpu.dimension_semantics<parallel>], iteration_bounds = array<i64: 1>, scalar_prefetch = 0 : i64, scratch_operands = 0 : i64, tpu.core_type = #tpu.core_type<tc>, window_params = [{transform_indices = @transform_0, window_bounds = array<i64: 32, 128>}, {pipeline_mode = #tpu.pipeline_mode<synchronous>, transform_indices = @transform_1, window_bounds = array<i64: 1, 128>}, {pipeline_mode = #tpu.pipeline_mode<synchronous>, transform_indices = @transform_2, window_bounds = array<i64: 1, 128>}, {transform_indices = @transform_3, window_bounds = array<i64: 32, 128>}]} {
    %c0 = arith.constant 0 : index
    %c0_0 = arith.constant 0 : index
    %0 = vector.load %arg1[%c0, %c0_0] : memref<32x128xbf16, #tpu.memory_space<vmem>>, vector<32x128xbf16>
    %1 = arith.extf %0 : vector<32x128xbf16> to vector<32x128xf32>
    %c0_1 = arith.constant 0 : index
    %c0_2 = arith.constant 0 : index
    %2 = vector.load %arg2[%c0_1, %c0_2] : memref<1x128xf32, #tpu.memory_space<vmem>>, vector<1x128xf32>
    %3 = vector.broadcast %2 : vector<1x128xf32> to vector<32x128xf32>
    %4 = arith.mulf %1, %3 : vector<32x128xf32>
    %c0_3 = arith.constant 0 : index
    %c0_4 = arith.constant 0 : index
    %5 = vector.load %arg3[%c0_3, %c0_4] : memref<1x128xf32, #tpu.memory_space<vmem>>, vector<1x128xf32>
    %6 = vector.broadcast %5 : vector<1x128xf32> to vector<32x128xf32>
    %7 = arith.addf %4, %6 : vector<32x128xf32>
    %cst = arith.constant 0.000000e+00 : f32
    %8 = vector.broadcast %cst : f32 to vector<32x128xf32>
    %9 = arith.maximumf %7, %8 : vector<32x128xf32>
    %c0_5 = arith.constant 0 : index
    %c0_6 = arith.constant 0 : index
    %10 = vector.load %arg4[%c0_5, %c0_6] : memref<32x128xf32, #tpu.memory_space<vmem>>, vector<32x128xf32>
    tpu.vector_store %arg4[%c0_5, %c0_6], %9 {strides = array<i32>} : memref<32x128xf32, #tpu.memory_space<vmem>>, vector<32x128xf32>,
    return
  }
  func.func @transform_0(%arg0: i32) -> (i32, i32) {
    %c0_i32 = arith.constant 0 : i32
    %c0_i32_0 = arith.constant 0 : i32
    return %arg0, %c0_i32 : i32, i32
  }
  func.func @transform_1(%arg0: i32) -> (i32, i32) {
    %c0_i32 = arith.constant 0 : i32
    %c0_i32_0 = arith.constant 0 : i32
    %c0_i32_1 = arith.constant 0 : i32
    return %c0_i32, %c0_i32_0 : i32, i32
  }
  func.func @transform_2(%arg0: i32) -> (i32, i32) {
    %c0_i32 = arith.constant 0 : i32
    %c0_i32_0 = arith.constant 0 : i32
    %c0_i32_1 = arith.constant 0 : i32
    return %c0_i32, %c0_i32_0 : i32, i32
  }
  func.func @transform_3(%arg0: i32) -> (i32, i32) {
    %c0_i32 = arith.constant 0 : i32
    %c0_i32_0 = arith.constant 0 : i32
    return %arg0, %c0_i32 : i32, i32
  }
}

</mosaic_0001>

<llo_original>
// kernel: down_conv2d_block.3
$region0: #{down_conv2d_block.3}
  #allocation0 [shape = 'u32[]', space=smem, size = 0x4, offset = 0x4, fixed_abs, tag = 'smem constant byte address 0x4 - core index']
  #allocation1 [shape = 'u32[72,128]{1,0:T(1,128)}', space=vmem, size = 0x9000, scoped, tag = 'internal scratch']
  %s0 = inlined_call_operand.vmem [shape: bf16[36,64], index: 0, kind: input, shape index: {}]
  %s1 = inlined_call_operand.vmem [shape: bf16[3,64,128], index: 1, kind: input, shape index: {}]
  %s2 = inlined_call_operand.vmem [shape: bf16[32,128], index: 2, kind: output, shape index: {0}]
  %s3 = inlined_call_operand.vmem [shape: f32[1,2,128], index: 3, kind: output, shape index: {1}]
  %4 = xla_tuple %s2, %s3
  %s5 = sld [smem:[#allocation0]]
  $region26: #{down_conv2d_block.3} parent=0
    _
  %s7 = ssub.s32 1, %s5
  %s8 = scalar_select 0, %s7, %s5
  // Predicated region
  $region2: #{down_conv2d_block.3} parent=0 // pred_check
    _
  $region3: #{down_conv2d_block.3} parent=0 // pred_check_branch
    %10 = sbr.rel (0) target = $region5
  $region4: #{down_conv2d_block.3} parent=0 // pred_region
    _
  $region5: #{down_conv2d_block.3} parent=0 // pred_fallthru
    _
  // Predicated region
  $region6: #{down_conv2d_block.3} parent=0 // pred_check
    _
  $region7: #{down_conv2d_block.3} parent=0 // pred_check_branch
    %12 = sbr.rel (0) target = $region9
  $region8: #{down_conv2d_block.3} parent=0 // pred_region
    _
  $region9: #{down_conv2d_block.3} parent=0 // pred_fallthru
    _
  %v14 = vld [vmem:[%s0] sm:$0xf]
  %v15 = vld [vmem:[%s0 + $0x4] sm:$0xf]
  %v16 = vld [vmem:[%s0 + $0x8] sm:$0xf]
  %v17 = vld [vmem:[%s0 + $0xc] sm:$0xf]
  %v18 = vld [vmem:[%s0 + $0x10] sm:$0x1]
  %v19 = vld [vmem:[%s1] sm:$0xf]
  %v20 = vld [vmem:[%s1 + $0x4] sm:$0xf]
  %v21 = vld [vmem:[%s1 + $0x8] sm:$0xf]
  %v22 = vld [vmem:[%s1 + $0xc] sm:$0xf]
  %v23 = vld [vmem:[%s1 + $0x10] sm:$0xf]
  %v24 = vld [vmem:[%s1 + $0x14] sm:$0xf]
  %v25 = vld [vmem:[%s1 + $0x18] sm:$0xf]
  %v26 = vld [vmem:[%s1 + $0x1c] sm:$0xf]
  %v27 = vld [vmem:[%s0 + $0x10] sm:$0x3]
  %s28 = scalar_lea.vmem %s1, 32
  %v29 = vld [vmem:[%s28] sm:$0xf]
  %v30 = vld [vmem:[%s28 + $0x4] sm:$0xf]
  %v31 = vld [vmem:[%s28 + $0x8] sm:$0xf]
  %v32 = vld [vmem:[%s28 + $0xc] sm:$0xf]
  %v33 = vld [vmem:[%s28 + $0x10] sm:$0xf]
  %v34 = vld [vmem:[%s28 + $0x14] sm:$0xf]
  %v35 = vld [vmem:[%s28 + $0x18] sm:$0xf]
  %v36 = vld [vmem:[%s28 + $0x1c] sm:$0xf]
  %v42 = vunpack.c.l.b16 %v14
  %v43 = vunpack.c.l.b16 %v15
  %v44 = vunpack.c.l.b16 %v16
  %v45 = vunpack.c.l.b16 %v17
  %v46 = vunpack.c.l.b16 %v27
  %v47 = vpack.c.b16 %v43, %v42
  %v48 = vpack.c.b16 %v45, %v44
  %v49 = vpack.c.b16 %v46, %v46
  %vm50 = vsmask.f32 7424
  %v52 = vshrl.u32 %v47, 16
  %v54 = vshll.u32 %v47, 16
  %v56 = vrot.slane %v54, 1
  %v57 = vor.u32 %v52, %v56
  %v59 = vshll.u32 %v48, 16
  %v61 = vrot.slane %v59, 1
  %v62 = vsel %vm50, %v57, %v61
  %v63 = vshrl.u32 %v48, 16
  %v65 = vor.u32 %v63, %v61
  %v67 = vshll.u32 %v49, 16
  %v69 = vrot.slane %v67, 1
  %v70 = vsel %vm50, %v65, %v69
  %v71 = vshrl.u32 %v49, 16
  %v73 = vor.u32 %v71, %v69
  %v82 = vunpack.c.l.b16 %v29
  %v83 = vunpack.c.l.b16 %v30
  %v84 = vunpack.c.l.b16 %v31
  %v85 = vunpack.c.l.b16 %v32
  %v86 = vunpack.c.l.b16 %v33
  %v87 = vunpack.c.l.b16 %v34
  %v88 = vunpack.c.l.b16 %v35
  %v89 = vunpack.c.l.b16 %v36
  %v90 = vpack.c.b16 %v83, %v82
  %v91 = vpack.c.b16 %v85, %v84
  %v92 = vpack.c.b16 %v87, %v86
  %v93 = vpack.c.b16 %v89, %v88
  %vm98 = vcmask 523264
  %v100 = vsel %vm98, %v62, 0
  %v103 = vsel %vm98, %v70, 0
  %v106 = vsel %vm98, %v73, 0
  %108 = vmatpush.bf16.msra.mxu0 0
  %109 = vmatpush.bf16.msra.mxu0 0
  %110 = vmatpush.bf16.msra.mxu0 0
  %111 = vmatpush.bf16.msra.mxu0 0
  %112 = vmatpush.bf16.msra.mxu0 %v93
  %113 = vmatpush.bf16.msra.mxu0 %v92
  %114 = vmatpush.bf16.msra.mxu0 %v91
  %115 = vmatpush.bf16.msra.mxu0 %v90
  %116 = vmatmul.bf16.gmra.mxu0 %v100
  %v117 = vpop.f32.mrf.mxu0
  %v118 = vadd.f32 0.0, %v117
  %v119 = vpop.f32.mrf.mxu0
  %v120 = vadd.f32 0.0, %v119
  %121 = vmatmul.bf16.gmra.mxu0 %v103
  %v122 = vpop.f32.mrf.mxu0
  %v123 = vadd.f32 0.0, %v122
  %v124 = vpop.f32.mrf.mxu0
  %v125 = vadd.f32 0.0, %v124
  %126 = vmatmul.bf16.gmra.mxu0 %v106
  %v127 = vpop.f32.mrf.mxu0
  %v128 = vadd.f32 0.0, %v127
  %v129 = vpop.f32.mrf.mxu0
  %130 = vdwg.mxu0
  %v132 = vunpack.c.l.b16 %v18
  %v133 = vpack.c.b16 %v132, %v132
  %v142 = vunpack.c.l.b16 %v19
  %v143 = vunpack.c.l.b16 %v20
  %v144 = vunpack.c.l.b16 %v21
  %v145 = vunpack.c.l.b16 %v22
  %v146 = vunpack.c.l.b16 %v23
  %v147 = vunpack.c.l.b16 %v24
  %v148 = vunpack.c.l.b16 %v25
  %v149 = vunpack.c.l.b16 %v26
  %v150 = vpack.c.b16 %v143, %v142
  %v151 = vpack.c.b16 %v145, %v144
  %v152 = vpack.c.b16 %v147, %v146
  %v153 = vpack.c.b16 %v149, %v148
  %v158 = vsel %vm98, %v47, 0
  %v160 = vsel %vm98, %v48, 0
  %v163 = vsel %vm98, %v133, 0
  %165 = vmatpush.bf16.msra.mxu0 0
  %166 = vmatpush.bf16.msra.mxu0 0
  %167 = vmatpush.bf16.msra.mxu0 0
  %168 = vmatpush.bf16.msra.mxu0 0
  %169 = vmatpush.bf16.msra.mxu0 %v153
  %170 = vmatpush.bf16.msra.mxu0 %v152
  %171 = vmatpush.bf16.msra.mxu0 %v151
  %172 = vmatpush.bf16.msra.mxu0 %v150
  %173 = vmatmul.bf16.gmra.mxu0 %v158
  %v174 = vpop.f32.mrf.mxu0
  %v175 = vadd.f32 %v118, %v174
  %v176 = vpop.f32.mrf.mxu0
  %v177 = vadd.f32 %v120, %v176
  %178 = vmatmul.bf16.gmra.mxu0 %v160
  %v179 = vpop.f32.mrf.mxu0
  %v180 = vadd.f32 %v123, %v179
  %v181 = vpop.f32.mrf.mxu0
  %v182 = vadd.f32 %v125, %v181
  %183 = vmatmul.bf16.gmra.mxu0 %v163
  %v184 = vpop.f32.mrf.mxu0
  %v185 = vadd.f32 %v128, %v184
  %v186 = vpop.f32.mrf.mxu0
  %187 = vdwg.mxu0
  %v188 = vld [vmem:[%s0] sm:$0xe]
  %s189 = scalar_lea.vmem %s1, 64
  %v190 = vld [vmem:[%s189] sm:$0xf]
  %v191 = vld [vmem:[%s189 + $0x4] sm:$0xf]
  %v192 = vld [vmem:[%s189 + $0x8] sm:$0xf]
  %v193 = vld [vmem:[%s189 + $0xc] sm:$0xf]
  %v194 = vld [vmem:[%s189 + $0x10] sm:$0xf]
  %v195 = vld [vmem:[%s189 + $0x14] sm:$0xf]
  %v196 = vld [vmem:[%s189 + $0x18] sm:$0xf]
  %v197 = vld [vmem:[%s189 + $0x1c] sm:$0xf]
  %v199 = vunpack.c.l.b16 %v188
  %v200 = vpack.c.b16 %v43, %v199
  %vm201 = vcmask 1046528
  %v202 = vrot.slane %v200, 1
  %v203 = vrot.slane %v48, 1
  %v204 = vsel %vm201, %v202, %v203
  %v205 = vrot.slane %v49, 1
  %v206 = vsel %vm201, %v203, %v205
  %v215 = vunpack.c.l.b16 %v190
  %v216 = vunpack.c.l.b16 %v191
  %v217 = vunpack.c.l.b16 %v192
  %v218 = vunpack.c.l.b16 %v193
  %v219 = vunpack.c.l.b16 %v194
  %v220 = vunpack.c.l.b16 %v195
  %v221 = vunpack.c.l.b16 %v196
  %v222 = vunpack.c.l.b16 %v197
  %v223 = vpack.c.b16 %v216, %v215
  %v224 = vpack.c.b16 %v218, %v217
  %v225 = vpack.c.b16 %v220, %v219
  %v226 = vpack.c.b16 %v222, %v221
  %v232 = vsel %vm98, %v204, 0
  %v235 = vsel %vm98, %v206, 0
  %v238 = vsel %vm98, %v205, 0
  %240 = vmatpush.bf16.msra.mxu0 0
  %241 = vmatpush.bf16.msra.mxu0 0
  %242 = vmatpush.bf16.msra.mxu0 0
  %243 = vmatpush.bf16.msra.mxu0 0
  %244 = vmatpush.bf16.msra.mxu0 %v226
  %245 = vmatpush.bf16.msra.mxu0 %v225
  %246 = vmatpush.bf16.msra.mxu0 %v224
  %247 = vmatpush.bf16.msra.mxu0 %v223
  %248 = vmatmul.bf16.gmra.mxu0 %v232
  %v249 = vpop.f32.mrf.mxu0
  %v250 = vadd.f32 0.0, %v249
  %v251 = vpop.f32.mrf.mxu0
  %v252 = vadd.f32 0.0, %v251
  %253 = vmatmul.bf16.gmra.mxu0 %v235
  %v254 = vpop.f32.mrf.mxu0
  %v255 = vadd.f32 0.0, %v254
  %v256 = vpop.f32.mrf.mxu0
  %v257 = vadd.f32 0.0, %v256
  %258 = vmatmul.bf16.gmra.mxu0 %v238
  %v259 = vpop.f32.mrf.mxu0
  %v260 = vadd.f32 0.0, %v259
  %v261 = vpop.f32.mrf.mxu0
  %262 = vdwg.mxu0
  %v263 = vadd.f32 %v175, %v250
  %v264 = vadd.f32 %v177, %v252
  %v265 = vadd.f32 %v180, %v255
  %v266 = vadd.f32 %v182, %v257
  %v267 = vadd.f32 %v185, %v260
  %v268 = vpack.c.bf16 %v263, %v263
  %v269 = vpack.c.bf16 %v264, %v264
  %270 = vst [vmem:[%s2] sm:$0xf] %v268
  %271 = vst [vmem:[%s2 + $0x4] sm:$0xf] %v269
  %v272 = vadd.f32 %v263, %v264
  %v273 = vrot.slane %v272, 4
  %v274 = vadd.f32 %v272, %v273
  %v275 = vrot.slane %v274, 2
  %v276 = vadd.f32 %v274, %v275
  %v277 = vrot.slane %v276, 1
  %v278 = vadd.f32 %v276, %v277
  %v279 = vadd.f32 %v278, 0.0
  %v280 = vmul.f32 %v263, %v263
  %v281 = vmul.f32 %v264, %v264
  %v282 = vadd.f32 %v280, %v281
  %v283 = vrot.slane %v282, 4
  %v284 = vadd.f32 %v282, %v283
  %v285 = vrot.slane %v284, 2
  %v286 = vadd.f32 %v284, %v285
  %v287 = vrot.slane %v286, 1
  %v288 = vadd.f32 %v286, %v287
  %v289 = vadd.f32 %v288, 0.0
  %v290 = vpack.c.bf16 %v265, %v265
  %v291 = vpack.c.bf16 %v266, %v266
  %v292 = vpack.c.bf16 %v267, %v267
  %vm296 = vcmask 1042432
  %vm297 = vcmask 1046532
  %vm298 = vmor %vm296, %vm297
  %v299 = vrot.slane %v290, 5
  %v300 = vrot.slane %v299, 4
  %v301 = vrot.slane %v291, 5
  %v302 = vsel %vm298, %v300, %v301
  %v303 = vrot.slane %v301, 4
  %v304 = vrot.slane %v292, 5
  %v305 = vsel %vm298, %v303, %v304
  %308 = vst [vmem:[%s2 + $0x8] sm:$0xf] %v302
  %309 = vst [vmem:[%s2 + $0xc] sm:$0xf] %v305
  %vm313 = vcmask 1045504
  %v314 = vrot.slane %v265, 2
  %v315 = vrot.slane %v266, 2
  %v316 = vsel %vm313, %v314, %v315
  %v317 = vrot.slane %v267, 2
  %v318 = vsel %vm313, %v315, %v317
  %v321 = vadd.f32 %v316, %v318
  %v322 = vrot.slane %v321, 4
  %v323 = vadd.f32 %v321, %v322
  %v324 = vrot.slane %v323, 2
  %v325 = vadd.f32 %v323, %v324
  %v326 = vrot.slane %v325, 1
  %v327 = vadd.f32 %v325, %v326
  %v328 = vadd.f32 %v279, %v327
  %v329 = vmul.f32 %v265, %v265
  %v330 = vmul.f32 %v266, %v266
  %v331 = vmul.f32 %v267, %v267
  %v335 = vrot.slane %v329, 2
  %v336 = vrot.slane %v330, 2
  %v337 = vsel %vm313, %v335, %v336
  %v338 = vrot.slane %v331, 2
  %v339 = vsel %vm313, %v336, %v338
  %v342 = vadd.f32 %v337, %v339
  %v343 = vrot.slane %v342, 4
  %v344 = vadd.f32 %v342, %v343
  %v345 = vrot.slane %v344, 2
  %v346 = vadd.f32 %v344, %v345
  %v347 = vrot.slane %v346, 1
  %v348 = vadd.f32 %v346, %v347
  %v349 = vadd.f32 %v289, %v348
  %350 = vst [vmem:[%s3] sm:$0x1] %v328
  %351 = vst [vmem:[%s3 + $0x1] sm:$0x1] %v349
  // Predicated region
  $region10: #{down_conv2d_block.3} parent=0 // pred_check
    _
  $region11: #{down_conv2d_block.3} parent=0 // pred_check_branch
    %353 = sbr.rel (0) target = $region13
  $region12: #{down_conv2d_block.3} parent=0 // pred_region
    _
  $region13: #{down_conv2d_block.3} parent=0 // pred_fallthru
    _
  // Predicated region
  $region14: #{down_conv2d_block.3} parent=0 // pred_check
    _
  $region15: #{down_conv2d_block.3} parent=0 // pred_check_branch
    %355 = sbr.rel (0) target = $region17
  $region16: #{down_conv2d_block.3} parent=0 // pred_region
    _
  $region17: #{down_conv2d_block.3} parent=0 // pred_fallthru
    _
  // Predicated region
  $region18: #{down_conv2d_block.3} parent=0 // pred_check
    _
  $region19: #{down_conv2d_block.3} parent=0 // pred_check_branch
    %357 = sbr.rel (0) target = $region21
  $region20: #{down_conv2d_block.3} parent=0 // pred_region
    _
  $region21: #{down_conv2d_block.3} parent=0 // pred_fallthru
    _
  // Predicated region
  $region22: #{down_conv2d_block.3} parent=0 // pred_check
    _
  $region23: #{down_conv2d_block.3} parent=0 // pred_check_branch
    %359 = sbr.rel (0) target = $region25
  $region24: #{down_conv2d_block.3} parent=0 // pred_region
    _
  $region25: #{down_conv2d_block.3} parent=0 // pred_fallthru
    _

// kernel: tile.28
$region0: #{tile.28}
  #allocation0 [shape = 's32[1]{0}', space=sflag, size = 0x4, scoped, tag = 'scoped memory for tile.28']
  %s0 = inlined_call_operand.vmem [shape: f32[8], index: 0, kind: input, shape index: {}]
  %s1 = inlined_call_operand.vmem [shape: f32[16,8], index: 1, kind: output, shape index: {}]
  // Predicated region
  $region2: #{tile.28} parent=0 // pred_check
    _
  $region3: #{tile.28} parent=0 // pred_check_branch
    %3 = sbr.rel (0) target = $region5
  $region4: #{tile.28} parent=0 // pred_region
    _
  $region5: #{tile.28} parent=0 // pred_fallthru
    _
  %v4 = vld [vmem:[%s0] ss:$0 sm:$0xff]
  %5 = vst [vmem:[%s1] sm:$0xff] %v4
  %s6 = scalar_lea.vmem %s1, 8
  %7 = vst [vmem:[%s6] sm:$0xff] %v4

// kernel: tile.29
$region0: #{tile.29}
  %s0 = inlined_call_operand.vmem [shape: f32[16,8], index: 0, kind: input, shape index: {}]
  %s1 = inlined_call_operand.vmem [shape: f32[1,128], index: 1, kind: output, shape index: {}]
  $region1: #{tile.29} parent=0
    #allocation0 [shape = 'u8[4096]{0}', space=vmem, size = 0x1000, scoped, tag = 'scoped mem for output reshape']
    %v2 = vld [vmem:[%s0] sm:$0x1]
    %vm3 = vcmask 64512
    %4 = vst.msk [vmem:[#allocation0] sm:$0x1] %vm3, %v2
    %s5 = scalar_lea.vmem %s0, 15
    %v6 = vld [vmem:[%s5] sm:$0x1]
    %7 = vrot.lane.b32.xlu0 %v6, 120
    %v8 = vpop.permute.xlu0 %7
    %vm9 = vcmask 1048512
    %10 = vst.msk [vmem:[#allocation0] sm:$0x1] %vm9, %v8
    %s11 = scalar_lea.vmem %s0, 14
    %v12 = vld [vmem:[%s11] sm:$0x1]
    %13 = vrot.lane.b32.xlu0 %v12, 112
    %v14 = vpop.permute.xlu0 %13
    %vm15 = vcmask 982912
    %16 = vst.msk [vmem:[#allocation0] sm:$0x1] %vm15, %v14
    %s17 = scalar_lea.vmem %s0, 13
    %v18 = vld [vmem:[%s17] sm:$0x1]
    %19 = vrot.lane.b32.xlu0 %v18, 104
    %v20 = vpop.permute.xlu0 %19
    %vm21 = vcmask 917312
    %22 = vst.msk [vmem:[#allocation0] sm:$0x1] %vm21, %v20
    %s23 = scalar_lea.vmem %s0, 12
    %v24 = vld [vmem:[%s23] sm:$0x1]
    %25 = vrot.lane.b32.xlu0 %v24, 96
    %v26 = vpop.permute.xlu0 %25
    %vm27 = vcmask 851712
    %28 = vst.msk [vmem:[#allocation0] sm:$0x1] %vm27, %v26
    %s29 = scalar_lea.vmem %s0, 11
    %v30 = vld [vmem:[%s29] sm:$0x1]
    %31 = vrot.lane.b32.xlu0 %v30, 88
    %v32 = vpop.permute.xlu0 %31
    %vm33 = vcmask 786112
    %34 = vst.msk [vmem:[#allocation0] sm:$0x1] %vm33, %v32
    %s35 = scalar_lea.vmem %s0, 10
    %v36 = vld [vmem:[%s35] sm:$0x1]
    %37 = vrot.lane.b32.xlu0 %v36, 80
    %v38 = vpop.permute.xlu0 %37
    %vm39 = vcmask 720512
    %40 = vst.msk [vmem:[#allocation0] sm:$0x1] %vm39, %v38
    %s41 = scalar_lea.vmem %s0, 9
    %v42 = vld [vmem:[%s41] sm:$0x1]
    %43 = vrot.lane.b32.xlu0 %v42, 72
    %v44 = vpop.permute.xlu0 %43
    %vm45 = vcmask 654912
    %46 = vst.msk [vmem:[#allocation0] sm:$0x1] %vm45, %v44
    %s47 = scalar_lea.vmem %s0, 8
    %v48 = vld [vmem:[%s47] sm:$0x1]
    %49 = vrot.lane.b32.xlu0 %v48, 64
    %v50 = vpop.permute.xlu0 %49
    %vm51 = vcmask 589312
    %52 = vst.msk [vmem:[#allocation0] sm:$0x1] %vm51, %v50
    %s53 = scalar_lea.vmem %s0, 7
    %v54 = vld [vmem:[%s53] sm:$0x1]
    %55 = vrot.lane.b32.xlu0 %v54, 56
    %v56 = vpop.permute.xlu0 %55
    %vm57 = vcmask 523712
    %58 = vst.msk [vmem:[#allocation0] sm:$0x1] %vm57, %v56
    %s59 = scalar_lea.vmem %s0, 6
    %v60 = vld [vmem:[%s59] sm:$0x1]
    %61 = vrot.lane.b32.xlu0 %v60, 48
    %v62 = vpop.permute.xlu0 %61
    %vm63 = vcmask 458112
    %64 = vst.msk [vmem:[#allocation0] sm:$0x1] %vm63, %v62
    %s65 = scalar_lea.vmem %s0, 5
    %v66 = vld [vmem:[%s65] sm:$0x1]
    %67 = vrot.lane.b32.xlu0 %v66, 40
    %v68 = vpop.permute.xlu0 %67
    %vm69 = vcmask 392512
    %70 = vst.msk [vmem:[#allocation0] sm:$0x1] %vm69, %v68
    %s71 = scalar_lea.vmem %s0, 4
    %v72 = vld [vmem:[%s71] sm:$0x1]
    %73 = vrot.lane.b32.xlu0 %v72, 32
    %v74 = vpop.permute.xlu0 %73
    %vm75 = vcmask 326912
    %76 = vst.msk [vmem:[#allocation0] sm:$0x1] %vm75, %v74
    %s77 = scalar_lea.vmem %s0, 3
    %v78 = vld [vmem:[%s77] sm:$0x1]
    %79 = vrot.lane.b32.xlu0 %v78, 24
    %v80 = vpop.permute.xlu0 %79
    %vm81 = vcmask 261312
    %82 = vst.msk [vmem:[#allocation0] sm:$0x1] %vm81, %v80
    %s83 = scalar_lea.vmem %s0, 2
    %v84 = vld [vmem:[%s83] sm:$0x1]
    %85 = vrot.lane.b32.xlu0 %v84, 16
    %v86 = vpop.permute.xlu0 %85
    %vm87 = vcmask 195712
    %88 = vst.msk [vmem:[#allocation0] sm:$0x1] %vm87, %v86
    %s89 = scalar_lea.vmem %s0, 1
    %v90 = vld [vmem:[%s89] sm:$0x1]
    %91 = vrot.lane.b32.xlu0 %v90, 8
    %v92 = vpop.permute.xlu0 %91
    %vm93 = vcmask 130112
    %94 = vst.msk [vmem:[#allocation0] sm:$0x1] %vm93, %v92
    %s96 = ssub.s32 2, 1
    %v97 = vld [vmem:[#allocation0] sm:%s96]
    %s99 = ssub.s32 2, 1
    %100 = vst [vmem:[%s1] sm:%s99] %v97

// kernel: down_conv2d_block.4
$region0: #{down_conv2d_block.4}
  #allocation0 [shape = 'u32[]', space=smem, size = 0x4, offset = 0x4, fixed_abs, tag = 'smem constant byte address 0x4 - core index']
  #allocation1 [shape = 'u32[72,128]{1,0:T(1,128)}', space=vmem, size = 0x9000, scoped, tag = 'internal scratch']
  #allocation2 [shape = 'bf16[36,128]{1,0:T(8,128)(2,1)}', space=vmem, size = 0x2800, scoped, tag = 'scratch operand']
  %s0 = inlined_call_operand.vmem [shape: bf16[32,128], index: 0, kind: input, shape index: {}]
  %s1 = inlined_call_operand.vmem [shape: f32[1,128], index: 1, kind: input, shape index: {}]
  %s2 = inlined_call_operand.vmem [shape: f32[1,128], index: 2, kind: input, shape index: {}]
  %s3 = inlined_call_operand.vmem [shape: bf16[3,128,128], index: 3, kind: input, shape index: {}]
  %s4 = inlined_call_operand.vmem [shape: bf16[32,128], index: 4, kind: output, shape index: {0}]
  %s5 = inlined_call_operand.vmem [shape: f32[1,2,128], index: 5, kind: output, shape index: {1}]
  %6 = xla_tuple %s4, %s5
  %s7 = sld [smem:[#allocation0]]
  $region34: #{down_conv2d_block.4} parent=0
    _
  %s9 = ssub.s32 1, %s7
  %s10 = scalar_select 0, %s9, %s7
  // Predicated region
  $region2: #{down_conv2d_block.4} parent=0 // pred_check
    _
  $region3: #{down_conv2d_block.4} parent=0 // pred_check_branch
    %12 = sbr.rel (0) target = $region5
  $region4: #{down_conv2d_block.4} parent=0 // pred_region
    _
  $region5: #{down_conv2d_block.4} parent=0 // pred_fallthru
    _
  // Predicated region
  $region6: #{down_conv2d_block.4} parent=0 // pred_check
    _
  $region7: #{down_conv2d_block.4} parent=0 // pred_check_branch
    %14 = sbr.rel (0) target = $region9
  $region8: #{down_conv2d_block.4} parent=0 // pred_region
    _
  $region9: #{down_conv2d_block.4} parent=0 // pred_fallthru
    _
  // Predicated region
  $region10: #{down_conv2d_block.4} parent=0 // pred_check
    _
  $region11: #{down_conv2d_block.4} parent=0 // pred_check_branch
    %16 = sbr.rel (0) target = $region13
  $region12: #{down_conv2d_block.4} parent=0 // pred_region
    _
  $region13: #{down_conv2d_block.4} parent=0 // pred_fallthru
    _
  // Predicated region
  $region14: #{down_conv2d_block.4} parent=0 // pred_check
    _
  $region15: #{down_conv2d_block.4} parent=0 // pred_check_branch
    %18 = sbr.rel (0) target = $region17
  $region16: #{down_conv2d_block.4} parent=0 // pred_region
    _
  $region17: #{down_conv2d_block.4} parent=0 // pred_fallthru
    _
  %v20 = vld [vmem:[%s0] sm:$0xf]
  %v21 = vld [vmem:[%s0 + $0x4] sm:$0xf]
  %v22 = vld [vmem:[%s0 + $0x8] sm:$0xf]
  %v23 = vld [vmem:[%s0 + $0xc] sm:$0xf]
  %v24 = vunpack.c.l.bf16 %v20
  %v25 = vunpack.c.l.bf16 %v21
  %v26 = vunpack.c.l.bf16 %v22
  %v27 = vunpack.c.l.bf16 %v23
  %v28 = vld [vmem:[%s1] sm:$0x1]
  %v30 = vperm.slane %v28, 0
  %v32 = vmul.f32 %v24, %v30
  %v33 = vmul.f32 %v25, %v30
  %v34 = vmul.f32 %v26, %v30
  %v35 = vmul.f32 %v27, %v30
  %v36 = vld [vmem:[%s2] sm:$0x1]
  %v38 = vperm.slane %v36, 0
  %v40 = vadd.f32 %v32, %v38
  %v41 = vadd.f32 %v33, %v38
  %v42 = vadd.f32 %v34, %v38
  %v43 = vadd.f32 %v35, %v38
  %v44 = vmax.f32 %v40, 0.0
  %v45 = vmax.f32 %v41, 0.0
  %v46 = vmax.f32 %v42, 0.0
  %v47 = vmax.f32 %v43, 0.0
  %v48 = vpack.c.bf16 %v44, %v44
  %v49 = vpack.c.bf16 %v45, %v45
  %v50 = vpack.c.bf16 %v46, %v46
  %v51 = vpack.c.bf16 %v47, %v47
  %vm52 = vcmask 1040384
  %vm53 = vsmask.f32 256
  %vm54 = vmand %vm52, %vm53
  %v55 = vld [vmem:[#allocation2] sm:$0x1]
  %v56 = vsel %vm54, 0, %v55
  %57 = vst [vmem:[#allocation2] sm:$0x1] %v56
  %vm58 = vsmask.f32 7938
  %vm59 = vmand %vm52, %vm58
  %v60 = vld [vmem:[#allocation2 + $0x8] sm:$0x1]
  %v61 = vsel %vm59, 0, %v60
  %62 = vst [vmem:[#allocation2 + $0x8] sm:$0x1] %v61
  %vm63 = vsmask.f32 4368
  %vm64 = vmor %vm53, %vm63
  %v66 = vshrl.u32 %v48, 16
  %v68 = vrot.slane %v66, 7
  %v69 = vshll.u32 %v48, 16
  %v71 = vor.u32 %v68, %v69
  %v72 = vrot.slane %v68, 4
  %v74 = vshrl.u32 %v49, 16
  %v76 = vrot.slane %v74, 7
  %v77 = vshll.u32 %v49, 16
  %v79 = vor.u32 %v76, %v77
  %v80 = vsel %vm64, %v72, %v79
  %v81 = vrot.slane %v76, 4
  %vm85 = vcmask 1043456
  %vm86 = vmand %vm85, %vm58
  %v87 = vld [vmem:[#allocation2] sm:$0xf]
  %v88 = vsel %vm86, %v71, %v87
  %89 = vst [vmem:[#allocation2] sm:$0xf] %v88
  %90 = vst [vmem:[#allocation2 + $0x4] sm:$0xf] %v80
  %v91 = vld [vmem:[#allocation2 + $0x8] sm:$0x1]
  %v92 = vsel %vm54, %v81, %v91
  %93 = vst [vmem:[#allocation2 + $0x8] sm:$0x1] %v92
  %vm94 = vcmask 1041409
  %vm95 = vsmask.f32 1280
  %vm96 = vmand %vm94, %vm95
  %v97 = vld [vmem:[#allocation2 + $0x8] sm:$0x2]
  %v98 = vsel %vm96, 0, %v97
  %99 = vst [vmem:[#allocation2 + $0x8] sm:$0x2] %v98
  %vm100 = vsmask.f32 7942
  %vm101 = vmand %vm94, %vm100
  %v102 = vld [vmem:[#allocation2 + $0x10] sm:$0x2]
  %v103 = vsel %vm101, 0, %v102
  %104 = vst [vmem:[#allocation2 + $0x10] sm:$0x2] %v103
  %vm105 = vsmask.f32 5392
  %vm106 = vmor %vm95, %vm105
  %v108 = vshrl.u32 %v50, 16
  %v110 = vrot.slane %v108, 6
  %v111 = vshll.u32 %v50, 16
  %v113 = vrot.slane %v111, 7
  %v114 = vor.u32 %v110, %v113
  %v115 = vrot.slane %v114, 4
  %v117 = vshrl.u32 %v51, 16
  %v119 = vrot.slane %v117, 6
  %v120 = vshll.u32 %v51, 16
  %v122 = vrot.slane %v120, 7
  %v123 = vor.u32 %v119, %v122
  %v124 = vsel %vm106, %v115, %v123
  %v125 = vrot.slane %v123, 4
  %vm129 = vcmask 1043457
  %vm130 = vmand %vm129, %vm100
  %v131 = vld [vmem:[#allocation2 + $0x8] sm:$0xe]
  %v132 = vsel %vm130, %v114, %v131
  %133 = vst [vmem:[#allocation2 + $0x8] sm:$0xe] %v132
  %134 = vst [vmem:[#allocation2 + $0xc] sm:$0xf] %v124
  %vm135 = vcmask 1041408
  %vm136 = vmand %vm135, %vm95
  %v137 = vld [vmem:[#allocation2 + $0x10] sm:$0x3]
  %v138 = vsel %vm136, %v125, %v137
  %139 = vst [vmem:[#allocation2 + $0x10] sm:$0x3] %v138
  %v140 = vld [vmem:[#allocation2] sm:$0xf]
  %v141 = vld [vmem:[#allocation2 + $0x4] sm:$0xf]
  %v142 = vld [vmem:[#allocation2 + $0x8] sm:$0xf]
  %v143 = vld [vmem:[#allocation2 + $0xc] sm:$0xf]
  %v144 = vld [vmem:[#allocation2 + $0x10] sm:$0x1]
  %v145 = vld [vmem:[%s3] sm:$0xf]
  %v146 = vld [vmem:[%s3 + $0x4] sm:$0xf]
  %v147 = vld [vmem:[%s3 + $0x8] sm:$0xf]
  %v148 = vld [vmem:[%s3 + $0xc] sm:$0xf]
  %v149 = vld [vmem:[%s3 + $0x10] sm:$0xf]
  %v150 = vld [vmem:[%s3 + $0x14] sm:$0xf]
  %v151 = vld [vmem:[%s3 + $0x18] sm:$0xf]
  %v152 = vld [vmem:[%s3 + $0x1c] sm:$0xf]
  %v153 = vld [vmem:[%s3 + $0x20] sm:$0xf]
  %v154 = vld [vmem:[%s3 + $0x24] sm:$0xf]
  %v155 = vld [vmem:[%s3 + $0x28] sm:$0xf]
  %v156 = vld [vmem:[%s3 + $0x2c] sm:$0xf]
  %v157 = vld [vmem:[%s3 + $0x30] sm:$0xf]
  %v158 = vld [vmem:[%s3 + $0x34] sm:$0xf]
  %v159 = vld [vmem:[%s3 + $0x38] sm:$0xf]
  %v160 = vld [vmem:[%s3 + $0x3c] sm:$0xf]
  %v161 = vld [vmem:[#allocation2 + $0x10] sm:$0x3]
  %s162 = scalar_lea.vmem %s3, 64
  %v163 = vld [vmem:[%s162] sm:$0xf]
  %v164 = vld [vmem:[%s162 + $0x4] sm:$0xf]
  %v165 = vld [vmem:[%s162 + $0x8] sm:$0xf]
  %v166 = vld [vmem:[%s162 + $0xc] sm:$0xf]
  %v167 = vld [vmem:[%s162 + $0x10] sm:$0xf]
  %v168 = vld [vmem:[%s162 + $0x14] sm:$0xf]
  %v169 = vld [vmem:[%s162 + $0x18] sm:$0xf]
  %v170 = vld [vmem:[%s162 + $0x1c] sm:$0xf]
  %v171 = vld [vmem:[%s162 + $0x20] sm:$0xf]
  %v172 = vld [vmem:[%s162 + $0x24] sm:$0xf]
  %v173 = vld [vmem:[%s162 + $0x28] sm:$0xf]
  %v174 = vld [vmem:[%s162 + $0x2c] sm:$0xf]
  %v175 = vld [vmem:[%s162 + $0x30] sm:$0xf]
  %v176 = vld [vmem:[%s162 + $0x34] sm:$0xf]
  %v177 = vld [vmem:[%s162 + $0x38] sm:$0xf]
  %v178 = vld [vmem:[%s162 + $0x3c] sm:$0xf]
  %v184 = vunpack.c.l.b16 %v140
  %v185 = vunpack.c.l.b16 %v141
  %v186 = vunpack.c.l.b16 %v142
  %v187 = vunpack.c.l.b16 %v143
  %v188 = vunpack.c.l.b16 %v161
  %v189 = vpack.c.b16 %v185, %v184
  %v190 = vpack.c.b16 %v187, %v186
  %v191 = vpack.c.b16 %v188, %v188
  %vm192 = vsmask.f32 7424
  %v194 = vshrl.u32 %v189, 16
  %v196 = vshll.u32 %v189, 16
  %v198 = vrot.slane %v196, 1
  %v199 = vor.u32 %v194, %v198
  %v201 = vshll.u32 %v190, 16
  %v203 = vrot.slane %v201, 1
  %v204 = vsel %vm192, %v199, %v203
  %v205 = vshrl.u32 %v190, 16
  %v207 = vor.u32 %v205, %v203
  %v209 = vshll.u32 %v191, 16
  %v211 = vrot.slane %v209, 1
  %v212 = vsel %vm192, %v207, %v211
  %v213 = vshrl.u32 %v191, 16
  %v215 = vor.u32 %v213, %v211
  %v235 = vunpack.c.l.b16 %v163
  %v236 = vunpack.c.l.b16 %v164
  %v237 = vunpack.c.l.b16 %v165
  %v238 = vunpack.c.l.b16 %v166
  %v239 = vunpack.c.l.b16 %v167
  %v240 = vunpack.c.l.b16 %v168
  %v241 = vunpack.c.l.b16 %v169
  %v242 = vunpack.c.l.b16 %v170
  %v243 = vunpack.c.l.b16 %v171
  %v244 = vunpack.c.l.b16 %v172
  %v245 = vunpack.c.l.b16 %v173
  %v246 = vunpack.c.l.b16 %v174
  %v247 = vunpack.c.l.b16 %v175
  %v248 = vunpack.c.l.b16 %v176
  %v249 = vunpack.c.l.b16 %v177
  %v250 = vunpack.c.l.b16 %v178
  %v251 = vpack.c.b16 %v236, %v235
  %v252 = vpack.c.b16 %v238, %v237
  %v253 = vpack.c.b16 %v240, %v239
  %v254 = vpack.c.b16 %v242, %v241
  %v255 = vpack.c.b16 %v244, %v243
  %v256 = vpack.c.b16 %v246, %v245
  %v257 = vpack.c.b16 %v248, %v247
  %v258 = vpack.c.b16 %v250, %v249
  %267 = vmatpush.bf16.msra.mxu0 %v258
  %268 = vmatpush.bf16.msra.mxu0 %v257
  %269 = vmatpush.bf16.msra.mxu0 %v256
  %270 = vmatpush.bf16.msra.mxu0 %v255
  %271 = vmatpush.bf16.msra.mxu0 %v254
  %272 = vmatpush.bf16.msra.mxu0 %v253
  %273 = vmatpush.bf16.msra.mxu0 %v252
  %274 = vmatpush.bf16.msra.mxu0 %v251
  %275 = vmatmul.bf16.gmra.mxu0 %v204
  %v276 = vpop.f32.mrf.mxu0
  %v277 = vadd.f32 0.0, %v276
  %v278 = vpop.f32.mrf.mxu0
  %v279 = vadd.f32 0.0, %v278
  %280 = vmatmul.bf16.gmra.mxu0 %v212
  %v281 = vpop.f32.mrf.mxu0
  %v282 = vadd.f32 0.0, %v281
  %v283 = vpop.f32.mrf.mxu0
  %v284 = vadd.f32 0.0, %v283
  %285 = vmatmul.bf16.gmra.mxu0 %v215
  %v286 = vpop.f32.mrf.mxu0
  %v287 = vadd.f32 0.0, %v286
  %v288 = vpop.f32.mrf.mxu0
  %289 = vdwg.mxu0
  %v291 = vunpack.c.l.b16 %v144
  %v292 = vpack.c.b16 %v291, %v291
  %v312 = vunpack.c.l.b16 %v145
  %v313 = vunpack.c.l.b16 %v146
  %v314 = vunpack.c.l.b16 %v147
  %v315 = vunpack.c.l.b16 %v148
  %v316 = vunpack.c.l.b16 %v149
  %v317 = vunpack.c.l.b16 %v150
  %v318 = vunpack.c.l.b16 %v151
  %v319 = vunpack.c.l.b16 %v152
  %v320 = vunpack.c.l.b16 %v153
  %v321 = vunpack.c.l.b16 %v154
  %v322 = vunpack.c.l.b16 %v155
  %v323 = vunpack.c.l.b16 %v156
  %v324 = vunpack.c.l.b16 %v157
  %v325 = vunpack.c.l.b16 %v158
  %v326 = vunpack.c.l.b16 %v159
  %v327 = vunpack.c.l.b16 %v160
  %v328 = vpack.c.b16 %v313, %v312
  %v329 = vpack.c.b16 %v315, %v314
  %v330 = vpack.c.b16 %v317, %v316
  %v331 = vpack.c.b16 %v319, %v318
  %v332 = vpack.c.b16 %v321, %v320
  %v333 = vpack.c.b16 %v323, %v322
  %v334 = vpack.c.b16 %v325, %v324
  %v335 = vpack.c.b16 %v327, %v326
  %344 = vmatpush.bf16.msra.mxu0 %v335
  %345 = vmatpush.bf16.msra.mxu0 %v334
  %346 = vmatpush.bf16.msra.mxu0 %v333
  %347 = vmatpush.bf16.msra.mxu0 %v332
  %348 = vmatpush.bf16.msra.mxu0 %v331
  %349 = vmatpush.bf16.msra.mxu0 %v330
  %350 = vmatpush.bf16.msra.mxu0 %v329
  %351 = vmatpush.bf16.msra.mxu0 %v328
  %352 = vmatmul.bf16.gmra.mxu0 %v189
  %v353 = vpop.f32.mrf.mxu0
  %v354 = vadd.f32 %v277, %v353
  %v355 = vpop.f32.mrf.mxu0
  %v356 = vadd.f32 %v279, %v355
  %357 = vmatmul.bf16.gmra.mxu0 %v190
  %v358 = vpop.f32.mrf.mxu0
  %v359 = vadd.f32 %v282, %v358
  %v360 = vpop.f32.mrf.mxu0
  %v361 = vadd.f32 %v284, %v360
  %362 = vmatmul.bf16.gmra.mxu0 %v292
  %v363 = vpop.f32.mrf.mxu0
  %v364 = vadd.f32 %v287, %v363
  %v365 = vpop.f32.mrf.mxu0
  %366 = vdwg.mxu0
  %v367 = vld [vmem:[#allocation2] sm:$0xe]
  %s368 = scalar_lea.vmem %s3, 128
  %v369 = vld [vmem:[%s368] sm:$0xf]
  %v370 = vld [vmem:[%s368 + $0x4] sm:$0xf]
  %v371 = vld [vmem:[%s368 + $0x8] sm:$0xf]
  %v372 = vld [vmem:[%s368 + $0xc] sm:$0xf]
  %v373 = vld [vmem:[%s368 + $0x10] sm:$0xf]
  %v374 = vld [vmem:[%s368 + $0x14] sm:$0xf]
  %v375 = vld [vmem:[%s368 + $0x18] sm:$0xf]
  %v376 = vld [vmem:[%s368 + $0x1c] sm:$0xf]
  %v377 = vld [vmem:[%s368 + $0x20] sm:$0xf]
  %v378 = vld [vmem:[%s368 + $0x24] sm:$0xf]
  %v379 = vld [vmem:[%s368 + $0x28] sm:$0xf]
  %v380 = vld [vmem:[%s368 + $0x2c] sm:$0xf]
  %v381 = vld [vmem:[%s368 + $0x30] sm:$0xf]
  %v382 = vld [vmem:[%s368 + $0x34] sm:$0xf]
  %v383 = vld [vmem:[%s368 + $0x38] sm:$0xf]
  %v384 = vld [vmem:[%s368 + $0x3c] sm:$0xf]
  %v386 = vunpack.c.l.b16 %v367
  %v387 = vpack.c.b16 %v185, %v386
  %vm388 = vcmask 1046528
  %v389 = vrot.slane %v387, 1
  %v390 = vrot.slane %v190, 1
  %v391 = vsel %vm388, %v389, %v390
  %v392 = vrot.slane %v191, 1
  %v393 = vsel %vm388, %v390, %v392
  %v413 = vunpack.c.l.b16 %v369
  %v414 = vunpack.c.l.b16 %v370
  %v415 = vunpack.c.l.b16 %v371
  %v416 = vunpack.c.l.b16 %v372
  %v417 = vunpack.c.l.b16 %v373
  %v418 = vunpack.c.l.b16 %v374
  %v419 = vunpack.c.l.b16 %v375
  %v420 = vunpack.c.l.b16 %v376
  %v421 = vunpack.c.l.b16 %v377
  %v422 = vunpack.c.l.b16 %v378
  %v423 = vunpack.c.l.b16 %v379
  %v424 = vunpack.c.l.b16 %v380
  %v425 = vunpack.c.l.b16 %v381
  %v426 = vunpack.c.l.b16 %v382
  %v427 = vunpack.c.l.b16 %v383
  %v428 = vunpack.c.l.b16 %v384
  %v429 = vpack.c.b16 %v414, %v413
  %v430 = vpack.c.b16 %v416, %v415
  %v431 = vpack.c.b16 %v418, %v417
  %v432 = vpack.c.b16 %v420, %v419
  %v433 = vpack.c.b16 %v422, %v421
  %v434 = vpack.c.b16 %v424, %v423
  %v435 = vpack.c.b16 %v426, %v425
  %v436 = vpack.c.b16 %v428, %v427
  %445 = vmatpush.bf16.msra.mxu0 %v436
  %446 = vmatpush.bf16.msra.mxu0 %v435
  %447 = vmatpush.bf16.msra.mxu0 %v434
  %448 = vmatpush.bf16.msra.mxu0 %v433
  %449 = vmatpush.bf16.msra.mxu0 %v432
  %450 = vmatpush.bf16.msra.mxu0 %v431
  %451 = vmatpush.bf16.msra.mxu0 %v430
  %452 = vmatpush.bf16.msra.mxu0 %v429
  %453 = vmatmul.bf16.gmra.mxu0 %v391
  %v454 = vpop.f32.mrf.mxu0
  %v455 = vadd.f32 0.0, %v454
  %v456 = vpop.f32.mrf.mxu0
  %v457 = vadd.f32 0.0, %v456
  %458 = vmatmul.bf16.gmra.mxu0 %v393
  %v459 = vpop.f32.mrf.mxu0
  %v460 = vadd.f32 0.0, %v459
  %v461 = vpop.f32.mrf.mxu0
  %v462 = vadd.f32 0.0, %v461
  %463 = vmatmul.bf16.gmra.mxu0 %v392
  %v464 = vpop.f32.mrf.mxu0
  %v465 = vadd.f32 0.0, %v464
  %v466 = vpop.f32.mrf.mxu0
  %467 = vdwg.mxu0
  %v468 = vadd.f32 %v354, %v455
  %v469 = vadd.f32 %v356, %v457
  %v470 = vadd.f32 %v359, %v460
  %v471 = vadd.f32 %v361, %v462
  %v472 = vadd.f32 %v364, %v465
  %v473 = vpack.c.bf16 %v468, %v468
  %v474 = vpack.c.bf16 %v469, %v469
  %475 = vst [vmem:[%s4] sm:$0xf] %v473
  %476 = vst [vmem:[%s4 + $0x4] sm:$0xf] %v474
  %v477 = vadd.f32 %v468, %v469
  %v478 = vrot.slane %v477, 4
  %v479 = vadd.f32 %v477, %v478
  %v480 = vrot.slane %v479, 2
  %v481 = vadd.f32 %v479, %v480
  %v482 = vrot.slane %v481, 1
  %v483 = vadd.f32 %v481, %v482
  %v484 = vadd.f32 %v483, 0.0
  %v485 = vmul.f32 %v468, %v468
  %v486 = vmul.f32 %v469, %v469
  %v487 = vadd.f32 %v485, %v486
  %v488 = vrot.slane %v487, 4
  %v489 = vadd.f32 %v487, %v488
  %v490 = vrot.slane %v489, 2
  %v491 = vadd.f32 %v489, %v490
  %v492 = vrot.slane %v491, 1
  %v493 = vadd.f32 %v491, %v492
  %v494 = vadd.f32 %v493, 0.0
  %v495 = vpack.c.bf16 %v470, %v470
  %v496 = vpack.c.bf16 %v471, %v471
  %v497 = vpack.c.bf16 %v472, %v472
  %vm501 = vcmask 1042432
  %vm502 = vcmask 1046532
  %vm503 = vmor %vm501, %vm502
  %v504 = vrot.slane %v495, 5
  %v505 = vrot.slane %v504, 4
  %v506 = vrot.slane %v496, 5
  %v507 = vsel %vm503, %v505, %v506
  %v508 = vrot.slane %v506, 4
  %v509 = vrot.slane %v497, 5
  %v510 = vsel %vm503, %v508, %v509
  %513 = vst [vmem:[%s4 + $0x8] sm:$0xf] %v507
  %514 = vst [vmem:[%s4 + $0xc] sm:$0xf] %v510
  %vm518 = vcmask 1045504
  %v519 = vrot.slane %v470, 2
  %v520 = vrot.slane %v471, 2
  %v521 = vsel %vm518, %v519, %v520
  %v522 = vrot.slane %v472, 2
  %v523 = vsel %vm518, %v520, %v522
  %v526 = vadd.f32 %v521, %v523
  %v527 = vrot.slane %v526, 4
  %v528 = vadd.f32 %v526, %v527
  %v529 = vrot.slane %v528, 2
  %v530 = vadd.f32 %v528, %v529
  %v531 = vrot.slane %v530, 1
  %v532 = vadd.f32 %v530, %v531
  %v533 = vadd.f32 %v484, %v532
  %v534 = vmul.f32 %v470, %v470
  %v535 = vmul.f32 %v471, %v471
  %v536 = vmul.f32 %v472, %v472
  %v540 = vrot.slane %v534, 2
  %v541 = vrot.slane %v535, 2
  %v542 = vsel %vm518, %v540, %v541
  %v543 = vrot.slane %v536, 2
  %v544 = vsel %vm518, %v541, %v543
  %v547 = vadd.f32 %v542, %v544
  %v548 = vrot.slane %v547, 4
  %v549 = vadd.f32 %v547, %v548
  %v550 = vrot.slane %v549, 2
  %v551 = vadd.f32 %v549, %v550
  %v552 = vrot.slane %v551, 1
  %v553 = vadd.f32 %v551, %v552
  %v554 = vadd.f32 %v494, %v553
  %555 = vst [vmem:[%s5] sm:$0x1] %v533
  %556 = vst [vmem:[%s5 + $0x1] sm:$0x1] %v554
  // Predicated region
  $region18: #{down_conv2d_block.4} parent=0 // pred_check
    _
  $region19: #{down_conv2d_block.4} parent=0 // pred_check_branch
    %558 = sbr.rel (0) target = $region21
  $region20: #{down_conv2d_block.4} parent=0 // pred_region
    _
  $region21: #{down_conv2d_block.4} parent=0 // pred_fallthru
    _
  // Predicated region
  $region22: #{down_conv2d_block.4} parent=0 // pred_check
    _
  $region23: #{down_conv2d_block.4} parent=0 // pred_check_branch
    %560 = sbr.rel (0) target = $region25
  $region24: #{down_conv2d_block.4} parent=0 // pred_region
    _
  $region25: #{down_conv2d_block.4} parent=0 // pred_fallthru
    _
  // Predicated region
  $region26: #{down_conv2d_block.4} parent=0 // pred_check
    _
  $region27: #{down_conv2d_block.4} parent=0 // pred_check_branch
    %562 = sbr.rel (0) target = $region29
  $region28: #{down_conv2d_block.4} parent=0 // pred_region
    _
  $region29: #{down_conv2d_block.4} parent=0 // pred_fallthru
    _
  // Predicated region
  $region30: #{down_conv2d_block.4} parent=0 // pred_check
    _
  $region31: #{down_conv2d_block.4} parent=0 // pred_check_branch
    %564 = sbr.rel (0) target = $region33
  $region32: #{down_conv2d_block.4} parent=0 // pred_region
    _
  $region33: #{down_conv2d_block.4} parent=0 // pred_fallthru
    _

// kernel: down_conv2d_block.5
$region0: #{down_conv2d_block.5}
  #allocation0 [shape = 'u32[]', space=smem, size = 0x4, offset = 0x4, fixed_abs, tag = 'smem constant byte address 0x4 - core index']
  #allocation1 [shape = 'u32[72,128]{1,0:T(1,128)}', space=vmem, size = 0x9000, scoped, tag = 'internal scratch']
  %s0 = inlined_call_operand.vmem [shape: bf16[32,128], index: 0, kind: input, shape index: {}]
  %s1 = inlined_call_operand.vmem [shape: f32[1,128], index: 1, kind: input, shape index: {}]
  %s2 = inlined_call_operand.vmem [shape: f32[1,128], index: 2, kind: input, shape index: {}]
  %s3 = inlined_call_operand.vmem [shape: f32[32,128], index: 3, kind: output, shape index: {}]
  %s4 = sld [smem:[#allocation0]]
  $region22: #{down_conv2d_block.5} parent=0
    _
  %s6 = ssub.s32 1, %s4
  %s7 = scalar_select 0, %s6, %s4
  // Predicated region
  $region2: #{down_conv2d_block.5} parent=0 // pred_check
    _
  $region3: #{down_conv2d_block.5} parent=0 // pred_check_branch
    %9 = sbr.rel (0) target = $region5
  $region4: #{down_conv2d_block.5} parent=0 // pred_region
    _
  $region5: #{down_conv2d_block.5} parent=0 // pred_fallthru
    _
  // Predicated region
  $region6: #{down_conv2d_block.5} parent=0 // pred_check
    _
  $region7: #{down_conv2d_block.5} parent=0 // pred_check_branch
    %11 = sbr.rel (0) target = $region9
  $region8: #{down_conv2d_block.5} parent=0 // pred_region
    _
  $region9: #{down_conv2d_block.5} parent=0 // pred_fallthru
    _
  // Predicated region
  $region10: #{down_conv2d_block.5} parent=0 // pred_check
    _
  $region11: #{down_conv2d_block.5} parent=0 // pred_check_branch
    %13 = sbr.rel (0) target = $region13
  $region12: #{down_conv2d_block.5} parent=0 // pred_region
    _
  $region13: #{down_conv2d_block.5} parent=0 // pred_fallthru
    _
  %v14 = vld [vmem:[%s0] sm:$0xf]
  %v15 = vld [vmem:[%s0 + $0x4] sm:$0xf]
  %v16 = vld [vmem:[%s0 + $0x8] sm:$0xf]
  %v17 = vld [vmem:[%s0 + $0xc] sm:$0xf]
  %v18 = vunpack.c.l.bf16 %v14
  %v19 = vunpack.c.l.bf16 %v15
  %v20 = vunpack.c.l.bf16 %v16
  %v21 = vunpack.c.l.bf16 %v17
  %v22 = vld [vmem:[%s1] sm:$0x1]
  %v24 = vperm.slane %v22, 0
  %v26 = vmul.f32 %v18, %v24
  %v27 = vmul.f32 %v19, %v24
  %v28 = vmul.f32 %v20, %v24
  %v29 = vmul.f32 %v21, %v24
  %v30 = vld [vmem:[%s2] sm:$0x1]
  %v32 = vperm.slane %v30, 0
  %v34 = vadd.f32 %v26, %v32
  %v35 = vadd.f32 %v27, %v32
  %v36 = vadd.f32 %v28, %v32
  %v37 = vadd.f32 %v29, %v32
  %v38 = vmax.f32 %v34, 0.0
  %v39 = vmax.f32 %v35, 0.0
  %v40 = vmax.f32 %v36, 0.0
  %v41 = vmax.f32 %v37, 0.0
  %42 = vst [vmem:[%s3] sm:$0xff] %v38
  %43 = vst [vmem:[%s3 + $0x8] sm:$0xff] %v39
  %44 = vst [vmem:[%s3 + $0x10] sm:$0xff] %v40
  %45 = vst [vmem:[%s3 + $0x18] sm:$0xff] %v41
  // Predicated region
  $region14: #{down_conv2d_block.5} parent=0 // pred_check
    _
  $region15: #{down_conv2d_block.5} parent=0 // pred_check_branch
    %47 = sbr.rel (0) target = $region17
  $region16: #{down_conv2d_block.5} parent=0 // pred_region
    _
  $region17: #{down_conv2d_block.5} parent=0 // pred_fallthru
    _
  // Predicated region
  $region18: #{down_conv2d_block.5} parent=0 // pred_check
    _
  $region19: #{down_conv2d_block.5} parent=0 // pred_check_branch
    %49 = sbr.rel (0) target = $region21
  $region20: #{down_conv2d_block.5} parent=0 // pred_region
    _
  $region21: #{down_conv2d_block.5} parent=0 // pred_fallthru
    _

</llo_original>
